<compile_context>
chip_gen: v7x
topology: tpu7x:2x2x1
jax: 0.10.0
libtpu: 0.0.40
codegen_flags: <defaults>
</compile_context>

<pallas_src>
import functools

import jax
import jax.numpy as jnp
from jax.experimental import pallas as pl
from jax.experimental.pallas import tpu as pltpu

LANE = 128
SUBLANE = 8


def _round_up(x, m):
    return ((x + m - 1) // m) * m


# ---------------------------------------------------------------------------
# Fused kernel
# ---------------------------------------------------------------------------
def fused_gcn_kernel(adj_ref, x_ref, w1_ref, b1_ref, w2_ref, b2_ref,
                     pool_ref, cw1_ref, cb1_ref, cw2_ref, cb2_ref,
                     node_ref, reps_ref, logits_ref,
                     acc_ref, h_ref, *, block_k):
    layer = pl.program_id(0)          # 0 -> conv1, 1 -> conv2 (+pool+classifier)
    k = pl.program_id(1)              # reduction block over node columns of Ahat
    nk = pl.num_programs(1)

    # Stage the (padded, bf16) input features once; both layers read their
    # per-block input features from this resident VMEM buffer.
    @pl.when((layer == 0) & (k == 0))
    def _():
        h_ref[...] = x_ref[...]

    @pl.when(k == 0)
    def _():
        acc_ref[...] = jnp.zeros_like(acc_ref)

    # acc += Ahat[:, k-block] @ feats[k-block]   (bf16 MXU, f32 accumulate)
    row0 = pl.multiple_of(k * block_k, block_k)
    feats = h_ref[pl.ds(row0, block_k), :]
    acc_ref[...] += jnp.dot(adj_ref[...], feats,
                            preferred_element_type=jnp.float32)

    # conv1 epilogue: h = relu((Ahat @ X) @ W1 + b1), kept resident in VMEM.
    @pl.when((layer == 0) & (k == nk - 1))
    def _():
        h1 = jnp.dot(acc_ref[...], w1_ref[...],
                     preferred_element_type=jnp.float32) + b1_ref[...]
        h1 = jnp.maximum(h1, 0.0)
        # TODO(synk): F.dropout(p=0.5, training=True) omitted; eval-mode identity.
        h_ref[...] = h1.astype(h_ref.dtype)

    # conv2 epilogue + global mean pool + 2-layer MLP classifier.
    @pl.when((layer == 1) & (k == nk - 1))
    def _():
        h2 = jnp.dot(acc_ref[...], w2_ref[...],
                     preferred_element_type=jnp.float32) + b2_ref[...]
        node_ref[...] = h2.astype(node_ref.dtype)
        reps = jnp.dot(pool_ref[...], h2, preferred_element_type=jnp.float32)
        reps_ref[...] = reps.astype(reps_ref.dtype)
        hc = jnp.dot(reps, cw1_ref[...],
                     preferred_element_type=jnp.float32) + cb1_ref[...]
        hc = jnp.maximum(hc, 0.0)
        logits = jnp.dot(hc, cw2_ref[...],
                         preferred_element_type=jnp.float32) + cb2_ref[...]
        logits_ref[...] = logits.astype(logits_ref.dtype)


def fused_gcn_call(adj_p, x_p, pool_p, params_p, *, block_k):
    n_pad, d = x_p.shape
    g_pad = pool_p.shape[0]
    assert n_pad % block_k == 0
    nk = n_pad // block_k

    def resident(shape):
        return pl.BlockSpec(shape, lambda l, k: (0, 0))

    # Explicit VMEM budget: double-buffered Ahat column tile (bf16) + resident
    # features / scratch / weights. block_k <= 512 keeps the plan v7x-safe.
    vmem_est = (2 * n_pad * block_k * 2           # Ahat tile, 2 buffers, bf16
                + n_pad * d * (2 + 2 + 4 + 4)     # x + h scratch (bf16), acc + node out (f32)
                + g_pad * n_pad * 4               # pooling matrix
                + 4 * d * d * 4                   # weight matrices
                + (2 << 20))                      # headroom
    vmem_limit = int(min(max(vmem_est, 16 << 20), 48 << 20))

    grid_spec = pltpu.PrefetchScalarGridSpec(
        num_scalar_prefetch=0,
        grid=(2, nk),
        in_specs=[
            pl.BlockSpec((n_pad, block_k), lambda l, k: (0, k)),  # Ahat column tiles
            resident((n_pad, d)),       # padded node features (bf16)
            resident((d, d)),           # conv1 weight
            resident((1, d)),           # conv1 bias
            resident((d, d)),           # conv2 weight
            resident((1, d)),           # conv2 bias
            resident((g_pad, n_pad)),   # mean-pool matrix
            resident((d, d)),           # classifier linear1 weight
            resident((1, d)),           # classifier linear1 bias
            resident((d, d)),           # classifier linear2 weight
            resident((1, d)),           # classifier linear2 bias
        ],
        out_specs=(
            resident((n_pad, d)),       # conv2 node embeddings
            resident((g_pad, d)),       # graph representations
            resident((g_pad, d)),       # logits
        ),
        scratch_shapes=[
            pltpu.VMEM((n_pad, d), jnp.float32),    # Ahat @ feats accumulator
            pltpu.VMEM((n_pad, d), jnp.bfloat16),   # staged feats / conv1 output
        ],
    )

    return pl.pallas_call(
        functools.partial(fused_gcn_kernel, block_k=block_k),
        out_shape=(jax.ShapeDtypeStruct((n_pad, d), jnp.float32),
                   jax.ShapeDtypeStruct((g_pad, d), jnp.float32),
                   jax.ShapeDtypeStruct((g_pad, d), jnp.float32)),
        grid_spec=grid_spec,
        compiler_params=pltpu.CompilerParams(
            dimension_semantics=("arbitrary", "arbitrary"),
            vmem_limit_bytes=vmem_limit,
        ),
    )(adj_p, x_p,
      params_p["w1"], params_p["b1"], params_p["w2"], params_p["b2"],
      pool_p,
      params_p["cw1"], params_p["cb1"], params_p["cw2"], params_p["cb2"])


# ---------------------------------------------------------------------------
# Hoisted glue (runs once per static graph / parameter set, not per forward)
# ---------------------------------------------------------------------------
def build_normalized_adj(edge_index, num_nodes):
    """Ahat = D^-1/2 (A + I) D^-1/2, matching PyG GCNConv gcn_norm defaults."""
    src, dst = edge_index
    adj = jnp.zeros((num_nodes, num_nodes), jnp.float32)
    adj = adj.at[dst, src].add(1.0)                      # messages flow src -> dst
    adj = adj + jnp.eye(num_nodes, dtype=jnp.float32)    # add self loops
    deg = adj.sum(axis=1)
    dinv = jnp.where(deg > 0, jax.lax.rsqrt(deg), 0.0)
    return dinv[:, None] * adj * dinv[None, :]


def build_pool_matrix(batch, num_graphs, num_nodes):
    one_hot = (batch[None, :] == jnp.arange(num_graphs)[:, None]).astype(jnp.float32)
    counts = one_hot.sum(axis=1, keepdims=True)
    return one_hot / jnp.maximum(counts, 1.0)            # [G, N] row-means


def precompute_graph(edge_index, batch, num_nodes, num_graphs, *, block_k=None):
    """Dense Ahat (bf16, padded) + pooling matrix, computed once per graph."""
    if block_k is None:
        block_k = 512 if num_nodes >= 512 else 128       # v7x-safe reduction tile
    n_pad = _round_up(num_nodes, block_k)
    g_pad = _round_up(num_graphs, SUBLANE)

    adj = build_normalized_adj(edge_index, num_nodes)
    adj_p = jnp.zeros((n_pad, n_pad), jnp.float32).at[:num_nodes, :num_nodes].set(adj)
    pool = build_pool_matrix(batch, num_graphs, num_nodes)
    pool_p = jnp.zeros((g_pad, n_pad), jnp.float32).at[:num_graphs, :num_nodes].set(pool)
    # bf16 halves HBM/VMEM bytes of the dominant O(N^2) operand; f32 accumulate
    # inside the kernel keeps the math stable.
    return adj_p.astype(jnp.bfloat16), pool_p, block_k, n_pad, g_pad


def pad_features(x, n_pad, d):
    n, f = x.shape
    return jnp.zeros((n_pad, d), jnp.bfloat16).at[:n, :f].set(x.astype(jnp.bfloat16))


def pad_params(params, d):
    def pad2(w):
        fi, fo = w.shape
        return jnp.zeros((d, d), jnp.float32).at[:fi, :fo].set(w)

    def pad1(b):
        return jnp.zeros((1, d), jnp.float32).at[0, :b.shape[0]].set(b)

    return {
        "w1": pad2(params["w1"]), "b1": pad1(params["b1"]),
        "w2": pad2(params["w2"]), "b2": pad1(params["b2"]),
        "cw1": pad2(params["cw1"]), "cb1": pad1(params["cb1"]),
        "cw2": pad2(params["cw2"]), "cb2": pad1(params["cb2"]),
    }


def gcn_forward(adj_p, x_p, pool_p, params_p, block_k, *,
                num_nodes, num_graphs, hidden_channels, out_channels):
    """Full forward -> (node_embeddings, graph_reps, logits), matching GCN.forward."""
    node_p, reps_p, logits_p = fused_gcn_call(adj_p, x_p, pool_p, params_p,
                                              block_k=block_k)
    node_emb = node_p[:num_nodes, :hidden_channels]
    graph_reps = reps_p[:num_graphs, :hidden_channels]
    logits = logits_p[:num_graphs, :out_channels]
    return node_emb, graph_reps, logits


def init_params(key, num_node_features, hidden_channels, out_channels):
    ks = jax.random.split(key, 8)

    def glorot(k, fan_in, fan_out):
        lim = (6.0 / (fan_in + fan_out)) ** 0.5
        return jax.random.uniform(k, (fan_in, fan_out), jnp.float32, -lim, lim)

    return {
        "w1": glorot(ks[0], num_node_features, hidden_channels),
        "b1": jnp.zeros((hidden_channels,), jnp.float32),
        "w2": glorot(ks[1], hidden_channels, hidden_channels),
        "b2": jnp.zeros((hidden_channels,), jnp.float32),
        "cw1": glorot(ks[2], hidden_channels, hidden_channels),
        "cb1": jax.random.uniform(ks[3], (hidden_channels,), jnp.float32, -0.1, 0.1),
        "cw2": glorot(ks[4], hidden_channels, out_channels),
        "cb2": jax.random.uniform(ks[5], (out_channels,), jnp.float32, -0.1, 0.1),
    }


if __name__ == "__main__":
    key = jax.random.PRNGKey(0)
    num_node_features = 8
    hidden_channels = 32
    out_channels = 8
    num_nodes = 16        # 2 graphs of 8 nodes each
    num_graphs = 2

    k_x, k_p = jax.random.split(key)
    x = jax.random.normal(k_x, (num_nodes, num_node_features), jnp.float32)

    # deterministic small graph: a ring within each graph, undirected edges
    src_list, dst_list = [], []
    for g in range(num_graphs):
        base = g * 8
        for i in range(8):
            a, b = base + i, base + (i + 1) % 8
            src_list += [a, b]
            dst_list += [b, a]
    edge_index = jnp.array([src_list, dst_list], dtype=jnp.int32)   # [2, E]
    batch = jnp.array([0] * 8 + [1] * 8, dtype=jnp.int32)

    params = init_params(k_p, num_node_features, hidden_channels, out_channels)

    # Hoisted precompute: adjacency / pooling matrix / padded inputs built once.
    adj_p, pool_p, block_k, n_pad, g_pad = precompute_graph(
        edge_index, batch, num_nodes, num_graphs)
    d = _round_up(max(num_node_features, hidden_channels, out_channels), LANE)
    x_p = pad_features(x, n_pad, d)
    params_p = pad_params(params, d)

    node_emb, graph_reps, logits = gcn_forward(
        adj_p, x_p, pool_p, params_p, block_k,
        num_nodes=num_nodes, num_graphs=num_graphs,
        hidden_channels=hidden_channels, out_channels=out_channels)
    jax.block_until_ready((node_emb, graph_reps, logits))

    assert node_emb.shape == (num_nodes, hidden_channels)
    assert graph_reps.shape == (num_graphs, hidden_channels)
    assert logits.shape == (num_graphs, out_channels)

    # Pure-JAX f32 reference; loose tolerance covers bf16 quantization of Ahat/X.
    adj_f32 = build_normalized_adj(edge_index, num_nodes)
    pool_f32 = build_pool_matrix(batch, num_graphs, num_nodes)
    h_ref = jnp.maximum(adj_f32 @ (x @ params["w1"]) + params["b1"], 0.0)
    h_ref = adj_f32 @ (h_ref @ params["w2"]) + params["b2"]
    reps_ref = pool_f32 @ h_ref
    logits_ref = (jnp.maximum(reps_ref @ params["cw1"] + params["cb1"], 0.0)
                  @ params["cw2"] + params["cb2"])
    assert jnp.allclose(node_emb, h_ref, rtol=1e-1, atol=1e-1)
    assert jnp.allclose(graph_reps, reps_ref, rtol=1e-1, atol=1e-1)
    assert jnp.allclose(logits, logits_ref, rtol=1e-1, atol=1e-1)

    print("KERNEL_OK")
</pallas_src>

<mosaic_0001>
module attributes {stable_mosaic.version = 11 : i64} {
  func.func @fused_gcn_kernel(%arg0: i32, %arg1: i32, %arg2: memref<128x128xbf16, #tpu.memory_space<vmem>>, %arg3: memref<128x128xbf16, #tpu.memory_space<vmem>>, %arg4: memref<128x128xf32, #tpu.memory_space<vmem>>, %arg5: memref<1x128xf32, #tpu.memory_space<vmem>>, %arg6: memref<128x128xf32, #tpu.memory_space<vmem>>, %arg7: memref<1x128xf32, #tpu.memory_space<vmem>>, %arg8: memref<8x128xf32, #tpu.memory_space<vmem>>, %arg9: memref<128x128xf32, #tpu.memory_space<vmem>>, %arg10: memref<1x128xf32, #tpu.memory_space<vmem>>, %arg11: memref<128x128xf32, #tpu.memory_space<vmem>>, %arg12: memref<1x128xf32, #tpu.memory_space<vmem>>, %arg13: memref<128x128xf32, #tpu.memory_space<vmem>>, %arg14: memref<8x128xf32, #tpu.memory_space<vmem>>, %arg15: memref<8x128xf32, #tpu.memory_space<vmem>>, %arg16: memref<128x128xf32, #tpu.memory_space<vmem>>, %arg17: memref<128x128xbf16, #tpu.memory_space<vmem>>) attributes {dimension_semantics = [#tpu.dimension_semantics<arbitrary>, #tpu.dimension_semantics<arbitrary>], iteration_bounds = array<i64: 2, 1>, scalar_prefetch = 0 : i64, scratch_operands = 2 : i64, tpu.core_type = #tpu.core_type<tc>, window_params = [{transform_indices = @transform_0, window_bounds = array<i64: 128, 128>}, {pipeline_mode = #tpu.pipeline_mode<synchronous>, transform_indices = @transform_1, window_bounds = array<i64: 128, 128>}, {pipeline_mode = #tpu.pipeline_mode<synchronous>, transform_indices = @transform_2, window_bounds = array<i64: 128, 128>}, {pipeline_mode = #tpu.pipeline_mode<synchronous>, transform_indices = @transform_3, window_bounds = array<i64: 1, 128>}, {pipeline_mode = #tpu.pipeline_mode<synchronous>, transform_indices = @transform_4, window_bounds = array<i64: 128, 128>}, {pipeline_mode = #tpu.pipeline_mode<synchronous>, transform_indices = @transform_5, window_bounds = array<i64: 1, 128>}, {pipeline_mode = #tpu.pipeline_mode<synchronous>, transform_indices = @transform_6, window_bounds = array<i64: 8, 128>}, {pipeline_mode = #tpu.pipeline_mode<synchronous>, transform_indices = @transform_7, window_bounds = array<i64: 128, 128>}, {pipeline_mode = #tpu.pipeline_mode<synchronous>, transform_indices = @transform_8, window_bounds = array<i64: 1, 128>}, {pipeline_mode = #tpu.pipeline_mode<synchronous>, transform_indices = @transform_9, window_bounds = array<i64: 128, 128>}, {pipeline_mode = #tpu.pipeline_mode<synchronous>, transform_indices = @transform_10, window_bounds = array<i64: 1, 128>}, {pipeline_mode = #tpu.pipeline_mode<synchronous>, transform_indices = @transform_11, window_bounds = array<i64: 128, 128>}, {pipeline_mode = #tpu.pipeline_mode<synchronous>, transform_indices = @transform_12, window_bounds = array<i64: 8, 128>}, {pipeline_mode = #tpu.pipeline_mode<synchronous>, transform_indices = @transform_13, window_bounds = array<i64: 8, 128>}]} {
    %c0_i32 = arith.constant 0 : i32
    %0 = arith.cmpi eq, %arg0, %c0_i32 : i32
    %c0_i32_0 = arith.constant 0 : i32
    %1 = arith.cmpi eq, %arg1, %c0_i32_0 : i32
    %2 = arith.andi %0, %1 : i1
    %3 = arith.extui %2 : i1 to i32
    %c0_i32_1 = arith.constant 0 : i32
    %4 = arith.cmpi ne, %3, %c0_i32_1 : i32
    scf.if %4 {
      %c0_15 = arith.constant 0 : index
      %c0_16 = arith.constant 0 : index
      %27 = vector.load %arg3[%c0_15, %c0_16] : memref<128x128xbf16, #tpu.memory_space<vmem>>, vector<128x128xbf16>
      %c0_17 = arith.constant 0 : index
      %c0_18 = arith.constant 0 : index
      %28 = vector.load %arg17[%c0_17, %c0_18] : memref<128x128xbf16, #tpu.memory_space<vmem>>, vector<128x128xbf16>
      tpu.vector_store %arg17[%c0_17, %c0_18], %27 {strides = array<i32>} : memref<128x128xbf16, #tpu.memory_space<vmem>>, vector<128x128xbf16>,
    } else {
    }
    %c0_i32_2 = arith.constant 0 : i32
    %5 = arith.cmpi eq, %arg1, %c0_i32_2 : i32
    %6 = arith.extui %5 : i1 to i32
    %c0_i32_3 = arith.constant 0 : i32
    %7 = arith.cmpi ne, %6, %c0_i32_3 : i32
    scf.if %7 {
      %cst_15 = arith.constant 0.000000e+00 : f32
      %27 = vector.broadcast %cst_15 : f32 to vector<128x128xf32>
      %c0_16 = arith.constant 0 : index
      %c0_17 = arith.constant 0 : index
      %28 = vector.load %arg16[%c0_16, %c0_17] : memref<128x128xf32, #tpu.memory_space<vmem>>, vector<128x128xf32>
      tpu.vector_store %arg16[%c0_16, %c0_17], %27 {strides = array<i32>} : memref<128x128xf32, #tpu.memory_space<vmem>>, vector<128x128xf32>,
    } else {
    }
    %c128_i32 = arith.constant 128 : i32
    %8 = arith.muli %arg1, %c128_i32 : i32
    %9 = tpu.assume_multiple %8, 128 : i32
    %10 = arith.index_cast %9 : i32 to index
    %c0 = arith.constant 0 : index
    %11 = vector.load %arg17[%10, %c0] : memref<128x128xbf16, #tpu.memory_space<vmem>>, vector<128x128xbf16>
    %c0_4 = arith.constant 0 : index
    %c0_5 = arith.constant 0 : index
    %12 = vector.load %arg16[%c0_4, %c0_5] : memref<128x128xf32, #tpu.memory_space<vmem>>, vector<128x128xf32>
    %c0_6 = arith.constant 0 : index
    %c0_7 = arith.constant 0 : index
    %13 = vector.load %arg2[%c0_6, %c0_7] : memref<128x128xbf16, #tpu.memory_space<vmem>>, vector<128x128xbf16>
    %cst = arith.constant dense<0.000000e+00> : vector<128x128xf32>
    %14 = tpu.matmul %13, %11, %cst {dimension_numbers = #tpu.dot_dimension_numbers<[1], [0], [0], [1], [0, 0, 1, 1], [], []>} : vector<128x128xbf16>, vector<128x128xbf16>, vector<128x128xf32> -> vector<128x128xf32>
    %15 = arith.addf %12, %14 : vector<128x128xf32>
    %c0_8 = arith.constant 0 : index
    %c0_9 = arith.constant 0 : index
    %16 = vector.load %arg16[%c0_8, %c0_9] : memref<128x128xf32, #tpu.memory_space<vmem>>, vector<128x128xf32>
    tpu.vector_store %arg16[%c0_8, %c0_9], %15 {strides = array<i32>} : memref<128x128xf32, #tpu.memory_space<vmem>>, vector<128x128xf32>,
    %c0_i32_10 = arith.constant 0 : i32
    %17 = arith.cmpi eq, %arg0, %c0_i32_10 : i32
    %c0_i32_11 = arith.constant 0 : i32
    %18 = arith.cmpi eq, %arg1, %c0_i32_11 : i32
    %19 = arith.andi %17, %18 : i1
    %20 = arith.extui %19 : i1 to i32
    %c0_i32_12 = arith.constant 0 : i32
    %21 = arith.cmpi ne, %20, %c0_i32_12 : i32
    scf.if %21 {
      %c0_15 = arith.constant 0 : index
      %c0_16 = arith.constant 0 : index
      %27 = vector.load %arg16[%c0_15, %c0_16] : memref<128x128xf32, #tpu.memory_space<vmem>>, vector<128x128xf32>
      %c0_17 = arith.constant 0 : index
      %c0_18 = arith.constant 0 : index
      %28 = vector.load %arg4[%c0_17, %c0_18] : memref<128x128xf32, #tpu.memory_space<vmem>>, vector<128x128xf32>
      %cst_19 = arith.constant dense<0.000000e+00> : vector<128x128xf32>
      %29 = tpu.matmul %27, %28, %cst_19 {dimension_numbers = #tpu.dot_dimension_numbers<[1], [0], [0], [1], [0, 0, 1, 1], [], []>} : vector<128x128xf32>, vector<128x128xf32>, vector<128x128xf32> -> vector<128x128xf32>
      %c0_20 = arith.constant 0 : index
      %c0_21 = arith.constant 0 : index
      %30 = vector.load %arg5[%c0_20, %c0_21] : memref<1x128xf32, #tpu.memory_space<vmem>>, vector<1x128xf32>
      %31 = vector.broadcast %30 : vector<1x128xf32> to vector<128x128xf32>
      %32 = arith.addf %29, %31 : vector<128x128xf32>
      %cst_22 = arith.constant 0.000000e+00 : f32
      %33 = vector.broadcast %cst_22 : f32 to vector<128x128xf32>
      %34 = arith.maximumf %32, %33 : vector<128x128xf32>
      %35 = arith.truncf %34 : vector<128x128xf32> to vector<128x128xbf16>
      %c0_23 = arith.constant 0 : index
      %c0_24 = arith.constant 0 : index
      %36 = vector.load %arg17[%c0_23, %c0_24] : memref<128x128xbf16, #tpu.memory_space<vmem>>, vector<128x128xbf16>
      tpu.vector_store %arg17[%c0_23, %c0_24], %35 {strides = array<i32>} : memref<128x128xbf16, #tpu.memory_space<vmem>>, vector<128x128xbf16>,
    } else {
    }
    %c1_i32 = arith.constant 1 : i32
    %22 = arith.cmpi eq, %arg0, %c1_i32 : i32
    %c0_i32_13 = arith.constant 0 : i32
    %23 = arith.cmpi eq, %arg1, %c0_i32_13 : i32
    %24 = arith.andi %22, %23 : i1
    %25 = arith.extui %24 : i1 to i32
    %c0_i32_14 = arith.constant 0 : i32
    %26 = arith.cmpi ne, %25, %c0_i32_14 : i32
    scf.if %26 {
      %c0_15 = arith.constant 0 : index
      %c0_16 = arith.constant 0 : index
      %27 = vector.load %arg16[%c0_15, %c0_16] : memref<128x128xf32, #tpu.memory_space<vmem>>, vector<128x128xf32>
      %c0_17 = arith.constant 0 : index
      %c0_18 = arith.constant 0 : index
      %28 = vector.load %arg6[%c0_17, %c0_18] : memref<128x128xf32, #tpu.memory_space<vmem>>, vector<128x128xf32>
      %cst_19 = arith.constant dense<0.000000e+00> : vector<128x128xf32>
      %29 = tpu.matmul %27, %28, %cst_19 {dimension_numbers = #tpu.dot_dimension_numbers<[1], [0], [0], [1], [0, 0, 1, 1], [], []>} : vector<128x128xf32>, vector<128x128xf32>, vector<128x128xf32> -> vector<128x128xf32>
      %c0_20 = arith.constant 0 : index
      %c0_21 = arith.constant 0 : index
      %30 = vector.load %arg7[%c0_20, %c0_21] : memref<1x128xf32, #tpu.memory_space<vmem>>, vector<1x128xf32>
      %31 = vector.broadcast %30 : vector<1x128xf32> to vector<128x128xf32>
      %32 = arith.addf %29, %31 : vector<128x128xf32>
      %c0_22 = arith.constant 0 : index
      %c0_23 = arith.constant 0 : index
      %33 = vector.load %arg13[%c0_22, %c0_23] : memref<128x128xf32, #tpu.memory_space<vmem>>, vector<128x128xf32>
      tpu.vector_store %arg13[%c0_22, %c0_23], %32 {strides = array<i32>} : memref<128x128xf32, #tpu.memory_space<vmem>>, vector<128x128xf32>,
      %c0_24 = arith.constant 0 : index
      %c0_25 = arith.constant 0 : index
      %34 = vector.load %arg8[%c0_24, %c0_25] : memref<8x128xf32, #tpu.memory_space<vmem>>, vector<8x128xf32>
      %cst_26 = arith.constant dense<0.000000e+00> : vector<8x128xf32>
      %35 = tpu.matmul %34, %32, %cst_26 {dimension_numbers = #tpu.dot_dimension_numbers<[1], [0], [0], [1], [0, 0, 1, 1], [], []>} : vector<8x128xf32>, vector<128x128xf32>, vector<8x128xf32> -> vector<8x128xf32>
      %c0_27 = arith.constant 0 : index
      %c0_28 = arith.constant 0 : index
      %36 = vector.load %arg14[%c0_27, %c0_28] : memref<8x128xf32, #tpu.memory_space<vmem>>, vector<8x128xf32>
      tpu.vector_store %arg14[%c0_27, %c0_28], %35 {strides = array<i32>} : memref<8x128xf32, #tpu.memory_space<vmem>>, vector<8x128xf32>,
      %c0_29 = arith.constant 0 : index
      %c0_30 = arith.constant 0 : index
      %37 = vector.load %arg9[%c0_29, %c0_30] : memref<128x128xf32, #tpu.memory_space<vmem>>, vector<128x128xf32>
      %cst_31 = arith.constant dense<0.000000e+00> : vector<8x128xf32>
      %38 = tpu.matmul %35, %37, %cst_31 {dimension_numbers = #tpu.dot_dimension_numbers<[1], [0], [0], [1], [0, 0, 1, 1], [], []>} : vector<8x128xf32>, vector<128x128xf32>, vector<8x128xf32> -> vector<8x128xf32>
      %c0_32 = arith.constant 0 : index
      %c0_33 = arith.constant 0 : index
      %39 = vector.load %arg10[%c0_32, %c0_33] : memref<1x128xf32, #tpu.memory_space<vmem>>, vector<1x128xf32>
      %40 = vector.broadcast %39 : vector<1x128xf32> to vector<8x128xf32>
      %41 = arith.addf %38, %40 : vector<8x128xf32>
      %cst_34 = arith.constant 0.000000e+00 : f32
      %42 = vector.broadcast %cst_34 : f32 to vector<8x128xf32>
      %43 = arith.maximumf %41, %42 : vector<8x128xf32>
      %c0_35 = arith.constant 0 : index
      %c0_36 = arith.constant 0 : index
      %44 = vector.load %arg11[%c0_35, %c0_36] : memref<128x128xf32, #tpu.memory_space<vmem>>, vector<128x128xf32>
      %cst_37 = arith.constant dense<0.000000e+00> : vector<8x128xf32>
      %45 = tpu.matmul %43, %44, %cst_37 {dimension_numbers = #tpu.dot_dimension_numbers<[1], [0], [0], [1], [0, 0, 1, 1], [], []>} : vector<8x128xf32>, vector<128x128xf32>, vector<8x128xf32> -> vector<8x128xf32>
      %c0_38 = arith.constant 0 : index
      %c0_39 = arith.constant 0 : index
      %46 = vector.load %arg12[%c0_38, %c0_39] : memref<1x128xf32, #tpu.memory_space<vmem>>, vector<1x128xf32>
      %47 = vector.broadcast %46 : vector<1x128xf32> to vector<8x128xf32>
      %48 = arith.addf %45, %47 : vector<8x128xf32>
      %c0_40 = arith.constant 0 : index
      %c0_41 = arith.constant 0 : index
      %49 = vector.load %arg15[%c0_40, %c0_41] : memref<8x128xf32, #tpu.memory_space<vmem>>, vector<8x128xf32>
      tpu.vector_store %arg15[%c0_40, %c0_41], %48 {strides = array<i32>} : memref<8x128xf32, #tpu.memory_space<vmem>>, vector<8x128xf32>,
    } else {
    }
    return
  }
  func.func @transform_0(%arg0: i32, %arg1: i32) -> (i32, i32) {
    %c0_i32 = arith.constant 0 : i32
    %c0_i32_0 = arith.constant 0 : i32
    return %c0_i32, %arg1 : i32, i32
  }
  func.func @transform_1(%arg0: i32, %arg1: i32) -> (i32, i32) {
    %c0_i32 = arith.constant 0 : i32
    %c0_i32_0 = arith.constant 0 : i32
    %c0_i32_1 = arith.constant 0 : i32
    return %c0_i32, %c0_i32_0 : i32, i32
  }
  func.func @transform_2(%arg0: i32, %arg1: i32) -> (i32, i32) {
    %c0_i32 = arith.constant 0 : i32
    %c0_i32_0 = arith.constant 0 : i32
    %c0_i32_1 = arith.constant 0 : i32
    return %c0_i32, %c0_i32_0 : i32, i32
  }
  func.func @transform_3(%arg0: i32, %arg1: i32) -> (i32, i32) {
    %c0_i32 = arith.constant 0 : i32
    %c0_i32_0 = arith.constant 0 : i32
    %c0_i32_1 = arith.constant 0 : i32
    return %c0_i32, %c0_i32_0 : i32, i32
  }
  func.func @transform_4(%arg0: i32, %arg1: i32) -> (i32, i32) {
    %c0_i32 = arith.constant 0 : i32
    %c0_i32_0 = arith.constant 0 : i32
    %c0_i32_1 = arith.constant 0 : i32
    return %c0_i32, %c0_i32_0 : i32, i32
  }
  func.func @transform_5(%arg0: i32, %arg1: i32) -> (i32, i32) {
    %c0_i32 = arith.constant 0 : i32
    %c0_i32_0 = arith.constant 0 : i32
    %c0_i32_1 = arith.constant 0 : i32
    return %c0_i32, %c0_i32_0 : i32, i32
  }
  func.func @transform_6(%arg0: i32, %arg1: i32) -> (i32, i32) {
    %c0_i32 = arith.constant 0 : i32
    %c0_i32_0 = arith.constant 0 : i32
    %c0_i32_1 = arith.constant 0 : i32
    return %c0_i32, %c0_i32_0 : i32, i32
  }
  func.func @transform_7(%arg0: i32, %arg1: i32) -> (i32, i32) {
    %c0_i32 = arith.constant 0 : i32
    %c0_i32_0 = arith.constant 0 : i32
    %c0_i32_1 = arith.constant 0 : i32
    return %c0_i32, %c0_i32_0 : i32, i32
  }
  func.func @transform_8(%arg0: i32, %arg1: i32) -> (i32, i32) {
    %c0_i32 = arith.constant 0 : i32
    %c0_i32_0 = arith.constant 0 : i32
    %c0_i32_1 = arith.constant 0 : i32
    return %c0_i32, %c0_i32_0 : i32, i32
  }
  func.func @transform_9(%arg0: i32, %arg1: i32) -> (i32, i32) {
    %c0_i32 = arith.constant 0 : i32
    %c0_i32_0 = arith.constant 0 : i32
    %c0_i32_1 = arith.constant 0 : i32
    return %c0_i32, %c0_i32_0 : i32, i32
  }
  func.func @transform_10(%arg0: i32, %arg1: i32) -> (i32, i32) {
    %c0_i32 = arith.constant 0 : i32
    %c0_i32_0 = arith.constant 0 : i32
    %c0_i32_1 = arith.constant 0 : i32
    return %c0_i32, %c0_i32_0 : i32, i32
  }
  func.func @transform_11(%arg0: i32, %arg1: i32) -> (i32, i32) {
    %c0_i32 = arith.constant 0 : i32
    %c0_i32_0 = arith.constant 0 : i32
    %c0_i32_1 = arith.constant 0 : i32
    return %c0_i32, %c0_i32_0 : i32, i32
  }
  func.func @transform_12(%arg0: i32, %arg1: i32) -> (i32, i32) {
    %c0_i32 = arith.constant 0 : i32
    %c0_i32_0 = arith.constant 0 : i32
    %c0_i32_1 = arith.constant 0 : i32
    return %c0_i32, %c0_i32_0 : i32, i32
  }
  func.func @transform_13(%arg0: i32, %arg1: i32) -> (i32, i32) {
    %c0_i32 = arith.constant 0 : i32
    %c0_i32_0 = arith.constant 0 : i32
    %c0_i32_1 = arith.constant 0 : i32
    return %c0_i32, %c0_i32_0 : i32, i32
  }
}

</mosaic_0001>

<llo_original>
// kernel: tpu_custom_call.1
$region0: #{tpu_custom_call.1}
  #allocation0 [shape = 'u32[]', space=smem, size = 0x4, offset = 0x4, fixed_abs, tag = 'smem constant byte address 0x4 - core index']
  #allocation1 [shape = 'u32[144,128]{1,0:T(1,128)}', space=vmem, size = 0x12000, scoped, tag = 'internal scratch']
  #allocation2 [shape = 'f32[128,128]{1,0:T(8,128)}', space=vmem, size = 0x10000, scoped, tag = 'scratch operand']
  #allocation3 [shape = 'bf16[128,128]{1,0:T(16,128)(2,1)}', space=vmem, size = 0x8000, scoped, tag = 'scratch operand']
  %s0 = inlined_call_operand.hbm [shape: bf16[128,128], index: 0, kind: input, shape index: {}]
  %s1 = inlined_call_operand.hbm [shape: bf16[128,128], index: 1, kind: input, shape index: {}]
  %s2 = inlined_call_operand.hbm [shape: f32[128,128], index: 2, kind: input, shape index: {}]
  %s3 = inlined_call_operand.vmem [shape: f32[1,128], index: 3, kind: input, shape index: {}]
  %s4 = inlined_call_operand.hbm [shape: f32[128,128], index: 4, kind: input, shape index: {}]
  %s5 = inlined_call_operand.vmem [shape: f32[1,128], index: 5, kind: input, shape index: {}]
  %s6 = inlined_call_operand.vmem [shape: f32[8,128], index: 6, kind: input, shape index: {}]
  %s7 = inlined_call_operand.hbm [shape: f32[128,128], index: 7, kind: input, shape index: {}]
  %s8 = inlined_call_operand.vmem [shape: f32[1,128], index: 8, kind: input, shape index: {}]
  %s9 = inlined_call_operand.hbm [shape: f32[128,128], index: 9, kind: input, shape index: {}]
  %s10 = inlined_call_operand.vmem [shape: f32[1,128], index: 10, kind: input, shape index: {}]
  %s11 = inlined_call_operand.hbm [shape: f32[128,128], index: 11, kind: output, shape index: {0}]
  %s12 = inlined_call_operand.hbm [shape: f32[8,128], index: 12, kind: output, shape index: {1}]
  %s13 = inlined_call_operand.hbm [shape: f32[8,128], index: 13, kind: output, shape index: {2}]
  %14 = xla_tuple %s11, %s12, %s13
  %s15 = sld [smem:[#allocation0]]
  $region133: #{tpu_custom_call.1} parent=0
    _
  %s17 = ssub.s32 1, %s15
  %s18 = scalar_select 0, %s17, %s15
  $region1: #{tpu_custom_call.1} parent=0
    #allocation4 [shape = 'u8[32768]{0}', space=vmem, size = 0x8000, scoped, tag = 'input window, operand 0, single buffered']
    #allocation5 [shape = 's32[2]{0}', space=sflag, size = 0x8, scoped, tag = 'scoped memory for tpu_custom_call.1']
    #allocation6 [shape = 's32[2]{0}', space=sflag, size = 0x8, scoped, tag = 'scoped memory for tpu_custom_call.1']
    #allocation7 [shape = 'u8[32768]{0}', space=vmem, size = 0x8000, scoped, tag = 'input window, operand 1, single buffered']
    #allocation8 [shape = 's32[1]{0}', space=sflag, size = 0x4, scoped, tag = 'scoped memory for tpu_custom_call.1']
    #allocation9 [shape = 'u8[65536]{0}', space=vmem, size = 0x10000, scoped, tag = 'input window, operand 2, single buffered']
    #allocation10 [shape = 'u8[65536]{0}', space=vmem, size = 0x10000, scoped, tag = 'input window, operand 4, single buffered']
    #allocation11 [shape = 's32[1]{0}', space=sflag, size = 0x4, scoped, tag = 'scoped memory for tpu_custom_call.1']
    #allocation12 [shape = 'u8[65536]{0}', space=vmem, size = 0x10000, scoped, tag = 'input window, operand 7, single buffered']
    #allocation13 [shape = 'u8[65536]{0}', space=vmem, size = 0x10000, scoped, tag = 'input window, operand 9, single buffered']
    #allocation14 [shape = 's32[1]{0}', space=sflag, size = 0x4, scoped, tag = 'scoped memory for tpu_custom_call.1']
    #allocation15 [shape = 'u8[65536]{0}', space=vmem, size = 0x10000, scoped, tag = 'output window, operand 0, single buffered']
    #allocation16 [shape = 'u8[4096]{0}', space=vmem, size = 0x1000, scoped, tag = 'output window, operand 1, single buffered']
    #allocation17 [shape = 's32[1]{0}', space=sflag, size = 0x4, scoped, tag = 'scoped memory for tpu_custom_call.1']
    #allocation18 [shape = 'u8[4096]{0}', space=vmem, size = 0x1000, scoped, tag = 'output window, operand 2, single buffered']
    %19 = vsyncpa [#allocation5], 0
    %20 = vsyncpa [#allocation8], 0
    %21 = vsyncpa [#allocation11], 0
    %22 = vsyncpa [#allocation14], 0
    %23 = vsyncpa [#allocation6], 0
    %24 = vsyncpa [#allocation17], 0
    loop: start=0, step=1, limit=4
    $region2: #{tpu_custom_call.1} parent=1 // loop_pre_header
      _
    $region3: #{tpu_custom_call.1} parent=1 // loop_header
      %s26 = sphi 0, %s30
      %p27 = scmp.ge.s32.totalorder %s26, 4
      %s33 = sphi 0, %s45
      %s34 = sphi 0, %s41
      %s35 = sphi 0, %s33
      %s36 = sphi 0, %s34
      %s37 = sphi 0, %s35
      %s38 = sphi 0, %s36
      %s48 = sphi 0, %s50
      %s51 = sphi 0, %s48
      %s52 = sphi 0, %s51
      %s68 = sphi 0, %s52
      %s72 = sphi 0, %s72
      %s74 = sphi 0, %s72
      %s75 = sphi 0, %s74
      %s89 = sphi 0, %s75
      %s93 = sphi 0, %s93
      %s95 = sphi 0, %s93
      %s96 = sphi 0, %s95
      %s110 = sphi 0, %s96
      %s114 = sphi 0, %s114
      %s116 = sphi 0, %s114
      %s117 = sphi 0, %s116
      %s131 = sphi 0, %s117
      %s135 = sphi 0, %s135
      %s137 = sphi 0, %s135
      %s138 = sphi 0, %s137
      %s152 = sphi 0, %s138
      %s156 = sphi 0, %s156
      %s158 = sphi 0, %s156
      %s159 = sphi 0, %s158
      %s173 = sphi 0, %s159
      %s177 = sphi 0, %s177
      %s179 = sphi 0, %s177
      %s180 = sphi 0, %s179
      %s194 = sphi 0, %s180
      %s198 = sphi 0, %s198
      %s200 = sphi 0, %s198
      %s201 = sphi 0, %s200
      %s215 = sphi 0, %s201
      %s219 = sphi 0, %s219
      %s221 = sphi 0, %s219
      %s222 = sphi 0, %s221
      %s236 = sphi 0, %s222
      %s240 = sphi 0, %s240
      %s242 = sphi 0, %s240
      %s243 = sphi 0, %s242
      %s257 = sphi 0, %s243
      %s261 = sphi 0, %s261
      %s263 = sphi 0, %s261
      %s264 = sphi 0, %s263
      %s278 = sphi 0, %s264
      %s282 = sphi 0, %s282
      %s284 = sphi 0, %s282
      %s285 = sphi 0, %s284
      %s299 = sphi 0, %s285
      %s303 = sphi 0, %s303
      %s305 = sphi 0, %s303
      %s306 = sphi 0, %s305
      %s320 = sphi 0, %s306
      %s324 = sphi 0, %s324
      %s326 = sphi 0, %s324
      %s327 = sphi 0, %s326
      %s341 = sphi 0, %s327
    $region4: #{tpu_custom_call.1} parent=1 // loop_header_branch
      %29 = sbr.rel (%p27) target = $region8
    $region5: #{tpu_custom_call.1} parent=1 // loop_body
      %s31 = ssub.s32 %s26, 1
      %s32 = ssub.s32 %s26, 2
      %s39 = sadd.s32 1, %s34
      %p40 = scmp.ge.s32.totalorder %s39, 1
      %s41 = scalar_select %p40, 0, %s39
      %s42 = sadd.s32 1, %s33
      %s43 = scalar_select %p40, %s42, %s33
      %p44 = scmp.ge.s32.totalorder %s43, 2
      %s45 = scalar_select %p44, 0, %s43
      %s46 = ssub.s32 %s34, %s41
      %p47 = scmp.eq.s32.totalorder %s46, 0
      %s49 = sadd.s32 %s48, 1
      %s50 = scalar_select %p47, %s48, %s49
      %p53 = pneg %p47
      %p54 = scmp.eq.s32.totalorder %s26, 1
      %p55 = por %p53, %p54
      %p56 = scmp.ne.s32.totalorder %s48, %s51
      %p57 = scmp.eq.s32.totalorder %s26, 0
      %p58 = por %p56, %p57
      %p59 = scmp.ne.s32.totalorder %s48, %s51
      %p60 = scmp.eq.s32.totalorder %s31, 1
      %p61 = por %p59, %p60
      %p62 = scmp.ne.s32.totalorder %s51, %s52
      %p63 = scmp.eq.s32.totalorder %s31, 0
      %p64 = por %p62, %p63
      %p65 = scmp.ne.s32.totalorder %s51, %s52
      %p66 = scmp.eq.s32.totalorder %s32, 1
      %p67 = por %p65, %p66
      %p69 = scmp.ne.s32.totalorder %s52, %s68
      %p70 = scmp.eq.s32.totalorder %s32, 0
      %p71 = por %p69, %p70
      %s73 = sadd.s32 %s72, 1
      %p76 = scmp.eq.s32.totalorder %s26, 1
      %p77 = scmp.ne.s32.totalorder %s72, %s74
      %p78 = scmp.eq.s32.totalorder %s26, 0
      %p79 = por %p77, %p78
      %p80 = scmp.ne.s32.totalorder %s72, %s74
      %p81 = scmp.eq.s32.totalorder %s31, 1
      %p82 = por %p80, %p81
      %p83 = scmp.ne.s32.totalorder %s74, %s75
      %p84 = scmp.eq.s32.totalorder %s31, 0
      %p85 = por %p83, %p84
      %p86 = scmp.ne.s32.totalorder %s74, %s75
      %p87 = scmp.eq.s32.totalorder %s32, 1
      %p88 = por %p86, %p87
      %p90 = scmp.ne.s32.totalorder %s75, %s89
      %p91 = scmp.eq.s32.totalorder %s32, 0
      %p92 = por %p90, %p91
      %s94 = sadd.s32 %s93, 1
      %p97 = scmp.eq.s32.totalorder %s26, 1
      %p98 = scmp.ne.s32.totalorder %s93, %s95
      %p99 = scmp.eq.s32.totalorder %s26, 0
      %p100 = por %p98, %p99
      %p101 = scmp.ne.s32.totalorder %s93, %s95
      %p102 = scmp.eq.s32.totalorder %s31, 1
      %p103 = por %p101, %p102
      %p104 = scmp.ne.s32.totalorder %s95, %s96
      %p105 = scmp.eq.s32.totalorder %s31, 0
      %p106 = por %p104, %p105
      %p107 = scmp.ne.s32.totalorder %s95, %s96
      %p108 = scmp.eq.s32.totalorder %s32, 1
      %p109 = por %p107, %p108
      %p111 = scmp.ne.s32.totalorder %s96, %s110
      %p112 = scmp.eq.s32.totalorder %s32, 0
      %p113 = por %p111, %p112
      %s115 = sadd.s32 %s114, 1
      %p118 = scmp.eq.s32.totalorder %s26, 1
      %p119 = scmp.ne.s32.totalorder %s114, %s116
      %p120 = scmp.eq.s32.totalorder %s26, 0
      %p121 = por %p119, %p120
      %p122 = scmp.ne.s32.totalorder %s114, %s116
      %p123 = scmp.eq.s32.totalorder %s31, 1
      %p124 = por %p122, %p123
      %p125 = scmp.ne.s32.totalorder %s116, %s117
      %p126 = scmp.eq.s32.totalorder %s31, 0
      %p127 = por %p125, %p126
      %p128 = scmp.ne.s32.totalorder %s116, %s117
      %p129 = scmp.eq.s32.totalorder %s32, 1
      %p130 = por %p128, %p129
      %p132 = scmp.ne.s32.totalorder %s117, %s131
      %p133 = scmp.eq.s32.totalorder %s32, 0
      %p134 = por %p132, %p133
      %s136 = sadd.s32 %s135, 1
      %p139 = scmp.eq.s32.totalorder %s26, 1
      %p140 = scmp.ne.s32.totalorder %s135, %s137
      %p141 = scmp.eq.s32.totalorder %s26, 0
      %p142 = por %p140, %p141
      %p143 = scmp.ne.s32.totalorder %s135, %s137
      %p144 = scmp.eq.s32.totalorder %s31, 1
      %p145 = por %p143, %p144
      %p146 = scmp.ne.s32.totalorder %s137, %s138
      %p147 = scmp.eq.s32.totalorder %s31, 0
      %p148 = por %p146, %p147
      %p149 = scmp.ne.s32.totalorder %s137, %s138
      %p150 = scmp.eq.s32.totalorder %s32, 1
      %p151 = por %p149, %p150
      %p153 = scmp.ne.s32.totalorder %s138, %s152
      %p154 = scmp.eq.s32.totalorder %s32, 0
      %p155 = por %p153, %p154
      %s157 = sadd.s32 %s156, 1
      %p160 = scmp.eq.s32.totalorder %s26, 1
      %p161 = scmp.ne.s32.totalorder %s156, %s158
      %p162 = scmp.eq.s32.totalorder %s26, 0
      %p163 = por %p161, %p162
      %p164 = scmp.ne.s32.totalorder %s156, %s158
      %p165 = scmp.eq.s32.totalorder %s31, 1
      %p166 = por %p164, %p165
      %p167 = scmp.ne.s32.totalorder %s158, %s159
      %p168 = scmp.eq.s32.totalorder %s31, 0
      %p169 = por %p167, %p168
      %p170 = scmp.ne.s32.totalorder %s158, %s159
      %p171 = scmp.eq.s32.totalorder %s32, 1
      %p172 = por %p170, %p171
      %p174 = scmp.ne.s32.totalorder %s159, %s173
      %p175 = scmp.eq.s32.totalorder %s32, 0
      %p176 = por %p174, %p175
      %s178 = sadd.s32 %s177, 1
      %p181 = scmp.eq.s32.totalorder %s26, 1
      %p182 = scmp.ne.s32.totalorder %s177, %s179
      %p183 = scmp.eq.s32.totalorder %s26, 0
      %p184 = por %p182, %p183
      %p185 = scmp.ne.s32.totalorder %s177, %s179
      %p186 = scmp.eq.s32.totalorder %s31, 1
      %p187 = por %p185, %p186
      %p188 = scmp.ne.s32.totalorder %s179, %s180
      %p189 = scmp.eq.s32.totalorder %s31, 0
      %p190 = por %p188, %p189
      %p191 = scmp.ne.s32.totalorder %s179, %s180
      %p192 = scmp.eq.s32.totalorder %s32, 1
      %p193 = por %p191, %p192
      %p195 = scmp.ne.s32.totalorder %s180, %s194
      %p196 = scmp.eq.s32.totalorder %s32, 0
      %p197 = por %p195, %p196
      %s199 = sadd.s32 %s198, 1
      %p202 = scmp.eq.s32.totalorder %s26, 1
      %p203 = scmp.ne.s32.totalorder %s198, %s200
      %p204 = scmp.eq.s32.totalorder %s26, 0
      %p205 = por %p203, %p204
      %p206 = scmp.ne.s32.totalorder %s198, %s200
      %p207 = scmp.eq.s32.totalorder %s31, 1
      %p208 = por %p206, %p207
      %p209 = scmp.ne.s32.totalorder %s200, %s201
      %p210 = scmp.eq.s32.totalorder %s31, 0
      %p211 = por %p209, %p210
      %p212 = scmp.ne.s32.totalorder %s200, %s201
      %p213 = scmp.eq.s32.totalorder %s32, 1
      %p214 = por %p212, %p213
      %p216 = scmp.ne.s32.totalorder %s201, %s215
      %p217 = scmp.eq.s32.totalorder %s32, 0
      %p218 = por %p216, %p217
      %s220 = sadd.s32 %s219, 1
      %p223 = scmp.eq.s32.totalorder %s26, 1
      %p224 = scmp.ne.s32.totalorder %s219, %s221
      %p225 = scmp.eq.s32.totalorder %s26, 0
      %p226 = por %p224, %p225
      %p227 = scmp.ne.s32.totalorder %s219, %s221
      %p228 = scmp.eq.s32.totalorder %s31, 1
      %p229 = por %p227, %p228
      %p230 = scmp.ne.s32.totalorder %s221, %s222
      %p231 = scmp.eq.s32.totalorder %s31, 0
      %p232 = por %p230, %p231
      %p233 = scmp.ne.s32.totalorder %s221, %s222
      %p234 = scmp.eq.s32.totalorder %s32, 1
      %p235 = por %p233, %p234
      %p237 = scmp.ne.s32.totalorder %s222, %s236
      %p238 = scmp.eq.s32.totalorder %s32, 0
      %p239 = por %p237, %p238
      %s241 = sadd.s32 %s240, 1
      %p244 = scmp.eq.s32.totalorder %s26, 1
      %p245 = scmp.ne.s32.totalorder %s240, %s242
      %p246 = scmp.eq.s32.totalorder %s26, 0
      %p247 = por %p245, %p246
      %p248 = scmp.ne.s32.totalorder %s240, %s242
      %p249 = scmp.eq.s32.totalorder %s31, 1
      %p250 = por %p248, %p249
      %p251 = scmp.ne.s32.totalorder %s242, %s243
      %p252 = scmp.eq.s32.totalorder %s31, 0
      %p253 = por %p251, %p252
      %p254 = scmp.ne.s32.totalorder %s242, %s243
      %p255 = scmp.eq.s32.totalorder %s32, 1
      %p256 = por %p254, %p255
      %p258 = scmp.ne.s32.totalorder %s243, %s257
      %p259 = scmp.eq.s32.totalorder %s32, 0
      %p260 = por %p258, %p259
      %s262 = sadd.s32 %s261, 1
      %p265 = scmp.eq.s32.totalorder %s26, 1
      %p266 = scmp.ne.s32.totalorder %s261, %s263
      %p267 = scmp.eq.s32.totalorder %s26, 0
      %p268 = por %p266, %p267
      %p269 = scmp.ne.s32.totalorder %s261, %s263
      %p270 = scmp.eq.s32.totalorder %s31, 1
      %p271 = por %p269, %p270
      %p272 = scmp.ne.s32.totalorder %s263, %s264
      %p273 = scmp.eq.s32.totalorder %s31, 0
      %p274 = por %p272, %p273
      %p275 = scmp.ne.s32.totalorder %s263, %s264
      %p276 = scmp.eq.s32.totalorder %s32, 1
      %p277 = por %p275, %p276
      %p279 = scmp.ne.s32.totalorder %s264, %s278
      %p280 = scmp.eq.s32.totalorder %s32, 0
      %p281 = por %p279, %p280
      %s283 = sadd.s32 %s282, 1
      %p286 = scmp.eq.s32.totalorder %s26, 1
      %p287 = scmp.ne.s32.totalorder %s282, %s284
      %p288 = scmp.eq.s32.totalorder %s26, 0
      %p289 = por %p287, %p288
      %p290 = scmp.ne.s32.totalorder %s282, %s284
      %p291 = scmp.eq.s32.totalorder %s31, 1
      %p292 = por %p290, %p291
      %p293 = scmp.ne.s32.totalorder %s284, %s285
      %p294 = scmp.eq.s32.totalorder %s31, 0
      %p295 = por %p293, %p294
      %p296 = scmp.ne.s32.totalorder %s284, %s285
      %p297 = scmp.eq.s32.totalorder %s32, 1
      %p298 = por %p296, %p297
      %p300 = scmp.ne.s32.totalorder %s285, %s299
      %p301 = scmp.eq.s32.totalorder %s32, 0
      %p302 = por %p300, %p301
      %s304 = sadd.s32 %s303, 1
      %p307 = scmp.eq.s32.totalorder %s26, 1
      %p308 = scmp.ne.s32.totalorder %s303, %s305
      %p309 = scmp.eq.s32.totalorder %s26, 0
      %p310 = por %p308, %p309
      %p311 = scmp.ne.s32.totalorder %s303, %s305
      %p312 = scmp.eq.s32.totalorder %s31, 1
      %p313 = por %p311, %p312
      %p314 = scmp.ne.s32.totalorder %s305, %s306
      %p315 = scmp.eq.s32.totalorder %s31, 0
      %p316 = por %p314, %p315
      %p317 = scmp.ne.s32.totalorder %s305, %s306
      %p318 = scmp.eq.s32.totalorder %s32, 1
      %p319 = por %p317, %p318
      %p321 = scmp.ne.s32.totalorder %s306, %s320
      %p322 = scmp.eq.s32.totalorder %s32, 0
      %p323 = por %p321, %p322
      %s325 = sadd.s32 %s324, 1
      %p328 = scmp.eq.s32.totalorder %s26, 1
      %p329 = scmp.ne.s32.totalorder %s324, %s326
      %p330 = scmp.eq.s32.totalorder %s26, 0
      %p331 = por %p329, %p330
      %p332 = scmp.ne.s32.totalorder %s324, %s326
      %p333 = scmp.eq.s32.totalorder %s31, 1
      %p334 = por %p332, %p333
      %p335 = scmp.ne.s32.totalorder %s326, %s327
      %p336 = scmp.eq.s32.totalorder %s31, 0
      %p337 = por %p335, %p336
      %p338 = scmp.ne.s32.totalorder %s326, %s327
      %p339 = scmp.eq.s32.totalorder %s32, 1
      %p340 = por %p338, %p339
      %p342 = scmp.ne.s32.totalorder %s327, %s341
      %p343 = scmp.eq.s32.totalorder %s32, 0
      %p344 = por %p342, %p343
      %p345 = scmp.le.s32.totalorder 1, %s26
      %p346 = scmp.lt.s32.totalorder %s26, 3
      %p347 = pnand %p345, %p346
      %p348 = pneg %p347
      // Predicated region
      $region9: #{tpu_custom_call.1} parent=5 // pred_check
        _
      $region10: #{tpu_custom_call.1} parent=5 // pred_check_branch
        %350 = sbr.rel (%p347) target = $region12
      $region11: #{tpu_custom_call.1} parent=5 // pred_region
        %s351 = ssub.s32 %s26, 1
        // Predicated region
        $region13: #{tpu_custom_call.1} parent=11 // pred_check
          %p352 = pneg %p64
        $region14: #{tpu_custom_call.1} parent=11 // pred_check_branch
          %354 = sbr.rel (%p352) target = $region16
        $region15: #{tpu_custom_call.1} parent=11 // pred_region
          %s356 = ssub.s32 1024, 1024
          %357 = vsyncadd [#allocation5], %s356
          %s358 = smul.addr %s36, 64
          %s359 = scalar_lea.hbm %s0, %s358
          %s360 = sshll.u32 [#allocation4], 4
          %s361 = int_to_ptr.vmem [resolvable:$true] %s360
          %366 = dma.hbm_to_vmem [thread:$0]  %s359, 1024, %s361, [#allocation5], 64, 64, 4
        $region16: #{tpu_custom_call.1} parent=11 // pred_fallthru
          _
        // Predicated region
        $region17: #{tpu_custom_call.1} parent=11 // pred_check
          %p367 = pneg %p85
        $region18: #{tpu_custom_call.1} parent=11 // pred_check_branch
          %369 = sbr.rel (%p367) target = $region20
        $region19: #{tpu_custom_call.1} parent=11 // pred_region
          %s371 = ssub.s32 1024, 1024
          %372 = vsyncadd [#allocation8], %s371
          %s373 = sshll.u32 [#allocation7], 4
          %s374 = int_to_ptr.vmem [resolvable:$true] %s373
          %379 = dma.hbm_to_vmem [thread:$0]  %s1, 1024, %s374, [#allocation8], 64, 64, 4
        $region20: #{tpu_custom_call.1} parent=11 // pred_fallthru
          _
        // Predicated region
        $region21: #{tpu_custom_call.1} parent=11 // pred_check
          %p380 = pneg %p106
        $region22: #{tpu_custom_call.1} parent=11 // pred_check_branch
          %382 = sbr.rel (%p380) target = $region24
        $region23: #{tpu_custom_call.1} parent=11 // pred_region
          %s384 = ssub.s32 2048, 2048
          %385 = vsyncadd [#allocation8], %s384
          %s386 = sshll.u32 [#allocation9], 4
          %s387 = int_to_ptr.vmem [resolvable:$true] %s386
          %392 = dma.hbm_to_vmem [thread:$0]  %s2, 2048, %s387, [#allocation8], 128, 128, 8
        $region24: #{tpu_custom_call.1} parent=11 // pred_fallthru
          _
        // Predicated region
        $region25: #{tpu_custom_call.1} parent=11 // pred_check
          %p393 = pneg %p127
        $region26: #{tpu_custom_call.1} parent=11 // pred_check_branch
          %395 = sbr.rel (%p393) target = $region28
        $region27: #{tpu_custom_call.1} parent=11 // pred_region
          _
        $region28: #{tpu_custom_call.1} parent=11 // pred_fallthru
          _
        // Predicated region
        $region29: #{tpu_custom_call.1} parent=11 // pred_check
          %p396 = pneg %p148
        $region30: #{tpu_custom_call.1} parent=11 // pred_check_branch
          %398 = sbr.rel (%p396) target = $region32
        $region31: #{tpu_custom_call.1} parent=11 // pred_region
          %s400 = ssub.s32 2048, 2048
          %401 = vsyncadd [#allocation11], %s400
          %s402 = sshll.u32 [#allocation10], 4
          %s403 = int_to_ptr.vmem [resolvable:$true] %s402
          %408 = dma.hbm_to_vmem [thread:$0]  %s4, 2048, %s403, [#allocation11], 128, 128, 8
        $region32: #{tpu_custom_call.1} parent=11 // pred_fallthru
          _
        // Predicated region
        $region33: #{tpu_custom_call.1} parent=11 // pred_check
          %p409 = pneg %p169
        $region34: #{tpu_custom_call.1} parent=11 // pred_check_branch
          %411 = sbr.rel (%p409) target = $region36
        $region35: #{tpu_custom_call.1} parent=11 // pred_region
          _
        $region36: #{tpu_custom_call.1} parent=11 // pred_fallthru
          _
        // Predicated region
        $region37: #{tpu_custom_call.1} parent=11 // pred_check
          %p412 = pneg %p190
        $region38: #{tpu_custom_call.1} parent=11 // pred_check_branch
          %414 = sbr.rel (%p412) target = $region40
        $region39: #{tpu_custom_call.1} parent=11 // pred_region
          _
        $region40: #{tpu_custom_call.1} parent=11 // pred_fallthru
          _
        // Predicated region
        $region41: #{tpu_custom_call.1} parent=11 // pred_check
          %p415 = pneg %p211
        $region42: #{tpu_custom_call.1} parent=11 // pred_check_branch
          %417 = sbr.rel (%p415) target = $region44
        $region43: #{tpu_custom_call.1} parent=11 // pred_region
          %s419 = ssub.s32 2048, 2048
          %420 = vsyncadd [#allocation11], %s419
          %s421 = sshll.u32 [#allocation12], 4
          %s422 = int_to_ptr.vmem [resolvable:$true] %s421
          %427 = dma.hbm_to_vmem [thread:$0]  %s7, 2048, %s422, [#allocation11], 128, 128, 8
        $region44: #{tpu_custom_call.1} parent=11 // pred_fallthru
          _
        // Predicated region
        $region45: #{tpu_custom_call.1} parent=11 // pred_check
          %p428 = pneg %p232
        $region46: #{tpu_custom_call.1} parent=11 // pred_check_branch
          %430 = sbr.rel (%p428) target = $region48
        $region47: #{tpu_custom_call.1} parent=11 // pred_region
          _
        $region48: #{tpu_custom_call.1} parent=11 // pred_fallthru
          _
        // Predicated region
        $region49: #{tpu_custom_call.1} parent=11 // pred_check
          %p431 = pneg %p253
        $region50: #{tpu_custom_call.1} parent=11 // pred_check_branch
          %433 = sbr.rel (%p431) target = $region52
        $region51: #{tpu_custom_call.1} parent=11 // pred_region
          %s435 = ssub.s32 2048, 2048
          %436 = vsyncadd [#allocation14], %s435
          %s437 = sshll.u32 [#allocation13], 4
          %s438 = int_to_ptr.vmem [resolvable:$true] %s437
          %443 = dma.hbm_to_vmem [thread:$0]  %s9, 2048, %s438, [#allocation14], 128, 128, 8
        $region52: #{tpu_custom_call.1} parent=11 // pred_fallthru
          _
        // Predicated region
        $region53: #{tpu_custom_call.1} parent=11 // pred_check
          %p444 = pneg %p274
        $region54: #{tpu_custom_call.1} parent=11 // pred_check_branch
          %446 = sbr.rel (%p444) target = $region56
        $region55: #{tpu_custom_call.1} parent=11 // pred_region
          _
        $region56: #{tpu_custom_call.1} parent=11 // pred_fallthru
          _
      $region12: #{tpu_custom_call.1} parent=5 // pred_fallthru
        _
      %p447 = scmp.lt.s32.totalorder %s26, 2
      // Predicated region
      $region57: #{tpu_custom_call.1} parent=5 // pred_check
        %p448 = pneg %p447
      $region58: #{tpu_custom_call.1} parent=5 // pred_check_branch
        %450 = sbr.rel (%p448) target = $region60
      $region59: #{tpu_custom_call.1} parent=5 // pred_region
        _
      $region60: #{tpu_custom_call.1} parent=5 // pred_fallthru
        _
      %p451 = scmp.le.s32.totalorder 1, %s26
      %p452 = scmp.lt.s32.totalorder %s26, 3
      %p453 = pnand %p451, %p452
      %p454 = pneg %p453
      // Predicated region
      $region61: #{tpu_custom_call.1} parent=5 // pred_check
        _
      $region62: #{tpu_custom_call.1} parent=5 // pred_check_branch
        %456 = sbr.rel (%p453) target = $region64
      $region63: #{tpu_custom_call.1} parent=5 // pred_region
        %s457 = ssub.s32 %s26, 1
        // Predicated region
        $region65: #{tpu_custom_call.1} parent=63 // pred_check
          %p458 = pneg %p64
        $region66: #{tpu_custom_call.1} parent=63 // pred_check_branch
          %460 = sbr.rel (%p458) target = $region68
        $region67: #{tpu_custom_call.1} parent=63 // pred_region
          %461 = dma.done [#allocation5], 1024
        $region68: #{tpu_custom_call.1} parent=63 // pred_fallthru
          _
        // Predicated region
        $region69: #{tpu_custom_call.1} parent=63 // pred_check
          %p462 = pneg %p85
        $region70: #{tpu_custom_call.1} parent=63 // pred_check_branch
          %464 = sbr.rel (%p462) target = $region72
        $region71: #{tpu_custom_call.1} parent=63 // pred_region
          %465 = dma.done [#allocation8], 1024
        $region72: #{tpu_custom_call.1} parent=63 // pred_fallthru
          _
        // Predicated region
        $region73: #{tpu_custom_call.1} parent=63 // pred_check
          %p466 = pneg %p106
        $region74: #{tpu_custom_call.1} parent=63 // pred_check_branch
          %468 = sbr.rel (%p466) target = $region76
        $region75: #{tpu_custom_call.1} parent=63 // pred_region
          %469 = dma.done [#allocation8], 2048
        $region76: #{tpu_custom_call.1} parent=63 // pred_fallthru
          _
        // Predicated region
        $region77: #{tpu_custom_call.1} parent=63 // pred_check
          %p470 = pneg %p148
        $region78: #{tpu_custom_call.1} parent=63 // pred_check_branch
          %472 = sbr.rel (%p470) target = $region80
        $region79: #{tpu_custom_call.1} parent=63 // pred_region
          %473 = dma.done [#allocation11], 2048
        $region80: #{tpu_custom_call.1} parent=63 // pred_fallthru
          _
        // Predicated region
        $region81: #{tpu_custom_call.1} parent=63 // pred_check
          %p474 = pneg %p211
        $region82: #{tpu_custom_call.1} parent=63 // pred_check_branch
          %476 = sbr.rel (%p474) target = $region84
        $region83: #{tpu_custom_call.1} parent=63 // pred_region
          %477 = dma.done [#allocation11], 2048
        $region84: #{tpu_custom_call.1} parent=63 // pred_fallthru
          _
        // Predicated region
        $region85: #{tpu_custom_call.1} parent=63 // pred_check
          %p478 = pneg %p253
        $region86: #{tpu_custom_call.1} parent=63 // pred_check_branch
          %480 = sbr.rel (%p478) target = $region88
        $region87: #{tpu_custom_call.1} parent=63 // pred_region
          %481 = dma.done [#allocation14], 2048
        $region88: #{tpu_custom_call.1} parent=63 // pred_fallthru
          _
        %p482 = pneg %p64
        %p483 = pneg %p61
        %p484 = pneg %p85
        %p485 = pneg %p82
        %p486 = pneg %p106
        %p487 = pneg %p103
        %p488 = pneg %p127
        %p489 = pneg %p124
        %p490 = pneg %p148
        %p491 = pneg %p145
        %p492 = pneg %p169
        %p493 = pneg %p166
        %p494 = pneg %p190
        %p495 = pneg %p187
        %p496 = pneg %p211
        %p497 = pneg %p208
        %p498 = pneg %p232
        %p499 = pneg %p229
        %p500 = pneg %p253
        %p501 = pneg %p250
        %p502 = pneg %p274
        %p503 = pneg %p271
        %p504 = pneg %p295
        %p505 = pneg %p292
        %p506 = pneg %p316
        %p507 = pneg %p313
        %p508 = pneg %p337
        %p509 = pneg %p334
        %p511 = scmp.eq.s32.totalorder %s35, 0
        %p512 = scmp.eq.s32.totalorder %s36, 0
        %p513 = pnand %p511, %p512
        %p514 = pneg %p513
        // Predicated region
        $region89: #{tpu_custom_call.1} parent=63 // pred_check
          _
        $region90: #{tpu_custom_call.1} parent=63 // pred_check_branch
          %516 = sbr.rel (%p513) target = $region92
        $region91: #{tpu_custom_call.1} parent=63 // pred_region
          %v517 = vld [vmem:[#allocation7] sm:$0xf]
          %v518 = vld [vmem:[#allocation7 + $0x4] sm:$0xf]
          %v519 = vld [vmem:[#allocation7 + $0x8] sm:$0xf]
          %v520 = vld [vmem:[#allocation7 + $0xc] sm:$0xf]
          %v521 = vld [vmem:[#allocation7 + $0x10] sm:$0xf]
          %v522 = vld [vmem:[#allocation7 + $0x14] sm:$0xf]
          %v523 = vld [vmem:[#allocation7 + $0x18] sm:$0xf]
          %v524 = vld [vmem:[#allocation7 + $0x1c] sm:$0xf]
          %v525 = vld [vmem:[#allocation7 + $0x20] sm:$0xf]
          %v526 = vld [vmem:[#allocation7 + $0x24] sm:$0xf]
          %v527 = vld [vmem:[#allocation7 + $0x28] sm:$0xf]
          %v528 = vld [vmem:[#allocation7 + $0x2c] sm:$0xf]
          %v529 = vld [vmem:[#allocation7 + $0x30] sm:$0xf]
          %v530 = vld [vmem:[#allocation7 + $0x34] sm:$0xf]
          %v531 = vld [vmem:[#allocation7 + $0x38] sm:$0xf]
          %v532 = vld [vmem:[#allocation7 + $0x3c] sm:$0xf]
          %v549 = vunpack.c.l.b16 %v517
          %v550 = vunpack.c.l.b16 %v518
          %v551 = vunpack.c.l.b16 %v519
          %v552 = vunpack.c.l.b16 %v520
          %v553 = vunpack.c.l.b16 %v521
          %v554 = vunpack.c.l.b16 %v522
          %v555 = vunpack.c.l.b16 %v523
          %v556 = vunpack.c.l.b16 %v524
          %v557 = vunpack.c.l.b16 %v525
          %v558 = vunpack.c.l.b16 %v526
          %v559 = vunpack.c.l.b16 %v527
          %v560 = vunpack.c.l.b16 %v528
          %v561 = vunpack.c.l.b16 %v529
          %v562 = vunpack.c.l.b16 %v530
          %v563 = vunpack.c.l.b16 %v531
          %v564 = vunpack.c.l.b16 %v532
          %v565 = vpack.c.b16 %v550, %v549
          %v566 = vpack.c.b16 %v552, %v551
          %v567 = vpack.c.b16 %v554, %v553
          %v568 = vpack.c.b16 %v556, %v555
          %v569 = vpack.c.b16 %v558, %v557
          %v570 = vpack.c.b16 %v560, %v559
          %v571 = vpack.c.b16 %v562, %v561
          %v572 = vpack.c.b16 %v564, %v563
          %581 = vst [vmem:[#allocation3] sm:$0xff] %v565
          %582 = vst [vmem:[#allocation3 + $0x8] sm:$0xff] %v566
          %583 = vst [vmem:[#allocation3 + $0x10] sm:$0xff] %v567
          %584 = vst [vmem:[#allocation3 + $0x18] sm:$0xff] %v568
          %585 = vst [vmem:[#allocation3 + $0x20] sm:$0xff] %v569
          %586 = vst [vmem:[#allocation3 + $0x28] sm:$0xff] %v570
          %587 = vst [vmem:[#allocation3 + $0x30] sm:$0xff] %v571
          %588 = vst [vmem:[#allocation3 + $0x38] sm:$0xff] %v572
        $region92: #{tpu_custom_call.1} parent=63 // pred_fallthru
          _
        // Predicated region
        $region93: #{tpu_custom_call.1} parent=63 // pred_check
          %p589 = pneg %p512
        $region94: #{tpu_custom_call.1} parent=63 // pred_check_branch
          %591 = sbr.rel (%p589) target = $region96
        $region95: #{tpu_custom_call.1} parent=63 // pred_region
          %592 = vst [vmem:[#allocation2] sm:$0xff] 0.0
          %593 = vst [vmem:[#allocation2 + $0x8] sm:$0xff] 0.0
          %594 = vst [vmem:[#allocation2 + $0x10] sm:$0xff] 0.0
          %595 = vst [vmem:[#allocation2 + $0x18] sm:$0xff] 0.0
          %596 = vst [vmem:[#allocation2 + $0x20] sm:$0xff] 0.0
          %597 = vst [vmem:[#allocation2 + $0x28] sm:$0xff] 0.0
          %598 = vst [vmem:[#allocation2 + $0x30] sm:$0xff] 0.0
          %599 = vst [vmem:[#allocation2 + $0x38] sm:$0xff] 0.0
          %600 = vst [vmem:[#allocation2 + $0x40] sm:$0xff] 0.0
          %601 = vst [vmem:[#allocation2 + $0x48] sm:$0xff] 0.0
          %602 = vst [vmem:[#allocation2 + $0x50] sm:$0xff] 0.0
          %603 = vst [vmem:[#allocation2 + $0x58] sm:$0xff] 0.0
          %604 = vst [vmem:[#allocation2 + $0x60] sm:$0xff] 0.0
          %605 = vst [vmem:[#allocation2 + $0x68] sm:$0xff] 0.0
          %606 = vst [vmem:[#allocation2 + $0x70] sm:$0xff] 0.0
          %607 = vst [vmem:[#allocation2 + $0x78] sm:$0xff] 0.0
        $region96: #{tpu_custom_call.1} parent=63 // pred_fallthru
          _
        %s608 = smul.u32 %s36, 128
        %s609 = sshra.s32 %s608, 4
        %s610 = sand.u32 %s608, 15
        %s611 = smul.addr %s609, 8
        %s612 = scalar_lea.vmem [#allocation3], %s611
        %v613 = vld [vmem:[%s612] sm:$0xff]
        %v614 = vld [vmem:[%s612 + $0x8] sm:$0xff]
        %v615 = vld [vmem:[%s612 + $0x10] sm:$0xff]
        %v616 = vld [vmem:[%s612 + $0x18] sm:$0xff]
        %v617 = vld [vmem:[%s612 + $0x20] sm:$0xff]
        %v618 = vld [vmem:[%s612 + $0x28] sm:$0xff]
        %v619 = vld [vmem:[%s612 + $0x30] sm:$0xff]
        %v620 = vld [vmem:[%s612 + $0x38] sm:$0xff]
        %v621 = vld [vmem:[#allocation2] sm:$0xff]
        %v622 = vld [vmem:[#allocation2 + $0x8] sm:$0xff]
        %v623 = vld [vmem:[#allocation2 + $0x10] sm:$0xff]
        %v624 = vld [vmem:[#allocation2 + $0x18] sm:$0xff]
        %v625 = vld [vmem:[#allocation2 + $0x20] sm:$0xff]
        %v626 = vld [vmem:[#allocation2 + $0x28] sm:$0xff]
        %v627 = vld [vmem:[#allocation2 + $0x30] sm:$0xff]
        %v628 = vld [vmem:[#allocation2 + $0x38] sm:$0xff]
        %v629 = vld [vmem:[#allocation2 + $0x40] sm:$0xff]
        %v630 = vld [vmem:[#allocation2 + $0x48] sm:$0xff]
        %v631 = vld [vmem:[#allocation2 + $0x50] sm:$0xff]
        %v632 = vld [vmem:[#allocation2 + $0x58] sm:$0xff]
        %v633 = vld [vmem:[#allocation2 + $0x60] sm:$0xff]
        %v634 = vld [vmem:[#allocation2 + $0x68] sm:$0xff]
        %v635 = vld [vmem:[#allocation2 + $0x70] sm:$0xff]
        %v636 = vld [vmem:[#allocation2 + $0x78] sm:$0xff]
        %v637 = vld [vmem:[#allocation4] sm:$0xf]
        %v638 = vld [vmem:[#allocation4 + $0x4] sm:$0xf]
        %v639 = vld [vmem:[#allocation4 + $0x8] sm:$0xf]
        %v640 = vld [vmem:[#allocation4 + $0xc] sm:$0xf]
        %v641 = vld [vmem:[#allocation4 + $0x10] sm:$0xf]
        %v642 = vld [vmem:[#allocation4 + $0x14] sm:$0xf]
        %v643 = vld [vmem:[#allocation4 + $0x18] sm:$0xf]
        %v644 = vld [vmem:[#allocation4 + $0x1c] sm:$0xf]
        %v645 = vld [vmem:[#allocation4 + $0x20] sm:$0xf]
        %v646 = vld [vmem:[#allocation4 + $0x24] sm:$0xf]
        %v647 = vld [vmem:[#allocation4 + $0x28] sm:$0xf]
        %v648 = vld [vmem:[#allocation4 + $0x2c] sm:$0xf]
        %v649 = vld [vmem:[#allocation4 + $0x30] sm:$0xf]
        %v650 = vld [vmem:[#allocation4 + $0x34] sm:$0xf]
        %v651 = vld [vmem:[#allocation4 + $0x38] sm:$0xf]
        %v652 = vld [vmem:[#allocation4 + $0x3c] sm:$0xf]
        %v669 = vunpack.c.l.b16 %v637
        %v670 = vunpack.c.l.b16 %v638
        %v671 = vunpack.c.l.b16 %v639
        %v672 = vunpack.c.l.b16 %v640
        %v673 = vunpack.c.l.b16 %v641
        %v674 = vunpack.c.l.b16 %v642
        %v675 = vunpack.c.l.b16 %v643
        %v676 = vunpack.c.l.b16 %v644
        %v677 = vunpack.c.l.b16 %v645
        %v678 = vunpack.c.l.b16 %v646
        %v679 = vunpack.c.l.b16 %v647
        %v680 = vunpack.c.l.b16 %v648
        %v681 = vunpack.c.l.b16 %v649
        %v682 = vunpack.c.l.b16 %v650
        %v683 = vunpack.c.l.b16 %v651
        %v684 = vunpack.c.l.b16 %v652
        %v685 = vpack.c.b16 %v670, %v669
        %v686 = vpack.c.b16 %v672, %v671
        %v687 = vpack.c.b16 %v674, %v673
        %v688 = vpack.c.b16 %v676, %v675
        %v689 = vpack.c.b16 %v678, %v677
        %v690 = vpack.c.b16 %v680, %v679
        %v691 = vpack.c.b16 %v682, %v681
        %v692 = vpack.c.b16 %v684, %v683
        %701 = vmatprep.subr.bf16.mxu0 0
        %702 = vmatpush1.bf16.msra.mxu0 %v613
        %703 = vmatprep.subr.bf16.mxu0 0
        %704 = vmatpush1.bf16.msra.mxu0 %v614
        %705 = vmatprep.subr.bf16.mxu0 0
        %706 = vmatpush1.bf16.msra.mxu0 %v615
        %707 = vmatprep.subr.bf16.mxu0 0
        %708 = vmatpush1.bf16.msra.mxu0 %v616
        %709 = vmatprep.subr.bf16.mxu0 0
        %710 = vmatpush1.bf16.msra.mxu0 %v617
        %711 = vmatprep.subr.bf16.mxu0 0
        %712 = vmatpush1.bf16.msra.mxu0 %v618
        %713 = vmatprep.subr.bf16.mxu0 0
        %714 = vmatpush1.bf16.msra.mxu0 %v619
        %715 = vmatprep.subr.bf16.mxu0 0
        %716 = vmatpush1.bf16.msra.mxu0 %v620
        %717 = vmatprep.subr.bf16.mxu0 0
        %718 = vmatpush1.bf16.msra.mxu0 0
        %719 = vmatprep.subr.bf16.mxu0 0
        %720 = vmatpush1.bf16.msra.mxu0 0
        %721 = vmatprep.subr.bf16.mxu0 0
        %722 = vmatpush1.bf16.msra.mxu0 0
        %723 = vmatprep.subr.bf16.mxu0 0
        %724 = vmatpush1.bf16.msra.mxu0 0
        %725 = vmatprep.subr.bf16.mxu0 0
        %726 = vmatpush1.bf16.msra.mxu0 0
        %727 = vmatprep.subr.bf16.mxu0 0
        %728 = vmatpush1.bf16.msra.mxu0 0
        %729 = vmatprep.subr.bf16.mxu0 0
        %730 = vmatpush1.bf16.msra.mxu0 0
        %731 = vmatprep.subr.bf16.mxu0 0
        %732 = vmatpush1.bf16.msra.mxu0 0
        %733 = vmatprep.mubr.bf16.mxu0 0
        %734 = vmatmul.mubr.bf16.gmra.mrb[0].mxu0 %v685
        %v735 = vpop.f32.mrb[0].mxu0
        %v736 = vadd.f32 0.0, %v735
        %v737 = vpop.f32.mrb[0].mxu0
        %v738 = vpop.f32.mrb[0].mxu0
        %v739 = vadd.f32 0.0, %v738
        %v740 = vpop.f32.mrb[0].mxu0
        %741 = vmatprep.mubr.bf16.mxu0 0
        %742 = vmatmul.mubr.bf16.gmra.mrb[0].mxu0 %v686
        %v743 = vpop.f32.mrb[0].mxu0
        %v744 = vadd.f32 0.0, %v743
        %v745 = vpop.f32.mrb[0].mxu0
        %v746 = vpop.f32.mrb[0].mxu0
        %v747 = vadd.f32 0.0, %v746
        %v748 = vpop.f32.mrb[0].mxu0
        %749 = vmatprep.mubr.bf16.mxu0 0
        %750 = vmatmul.mubr.bf16.gmra.mrb[0].mxu0 %v687
        %v751 = vpop.f32.mrb[0].mxu0
        %v752 = vadd.f32 0.0, %v751
        %v753 = vpop.f32.mrb[0].mxu0
        %v754 = vpop.f32.mrb[0].mxu0
        %v755 = vadd.f32 0.0, %v754
        %v756 = vpop.f32.mrb[0].mxu0
        %757 = vmatprep.mubr.bf16.mxu0 0
        %758 = vmatmul.mubr.bf16.gmra.mrb[0].mxu0 %v688
        %v759 = vpop.f32.mrb[0].mxu0
        %v760 = vadd.f32 0.0, %v759
        %v761 = vpop.f32.mrb[0].mxu0
        %v762 = vpop.f32.mrb[0].mxu0
        %v763 = vadd.f32 0.0, %v762
        %v764 = vpop.f32.mrb[0].mxu0
        %765 = vmatprep.mubr.bf16.mxu0 0
        %766 = vmatmul.mubr.bf16.gmra.mrb[0].mxu0 %v689
        %v767 = vpop.f32.mrb[0].mxu0
        %v768 = vadd.f32 0.0, %v767
        %v769 = vpop.f32.mrb[0].mxu0
        %v770 = vpop.f32.mrb[0].mxu0
        %v771 = vadd.f32 0.0, %v770
        %v772 = vpop.f32.mrb[0].mxu0
        %773 = vmatprep.mubr.bf16.mxu0 0
        %774 = vmatmul.mubr.bf16.gmra.mrb[0].mxu0 %v690
        %v775 = vpop.f32.mrb[0].mxu0
        %v776 = vadd.f32 0.0, %v775
        %v777 = vpop.f32.mrb[0].mxu0
        %v778 = vpop.f32.mrb[0].mxu0
        %v779 = vadd.f32 0.0, %v778
        %v780 = vpop.f32.mrb[0].mxu0
        %781 = vmatprep.mubr.bf16.mxu0 0
        %782 = vmatmul.mubr.bf16.gmra.mrb[0].mxu0 %v691
        %v783 = vpop.f32.mrb[0].mxu0
        %v784 = vadd.f32 0.0, %v783
        %v785 = vpop.f32.mrb[0].mxu0
        %v786 = vpop.f32.mrb[0].mxu0
        %v787 = vadd.f32 0.0, %v786
        %v788 = vpop.f32.mrb[0].mxu0
        %789 = vmatprep.mubr.bf16.mxu0 0
        %790 = vmatmul.mubr.bf16.gmra.mrb[0].mxu0 %v692
        %v791 = vpop.f32.mrb[0].mxu0
        %v792 = vadd.f32 0.0, %v791
        %v793 = vpop.f32.mrb[0].mxu0
        %v794 = vpop.f32.mrb[0].mxu0
        %v795 = vadd.f32 0.0, %v794
        %v796 = vpop.f32.mrb[0].mxu0
        %797 = vdwg.mxu0
        %v798 = vadd.f32 %v621, %v736
        %v799 = vadd.f32 %v622, %v739
        %v800 = vadd.f32 %v623, %v744
        %v801 = vadd.f32 %v624, %v747
        %v802 = vadd.f32 %v625, %v752
        %v803 = vadd.f32 %v626, %v755
        %v804 = vadd.f32 %v627, %v760
        %v805 = vadd.f32 %v628, %v763
        %v806 = vadd.f32 %v629, %v768
        %v807 = vadd.f32 %v630, %v771
        %v808 = vadd.f32 %v631, %v776
        %v809 = vadd.f32 %v632, %v779
        %v810 = vadd.f32 %v633, %v784
        %v811 = vadd.f32 %v634, %v787
        %v812 = vadd.f32 %v635, %v792
        %v813 = vadd.f32 %v636, %v795
        %814 = vst [vmem:[#allocation2] sm:$0xff] %v798
        %815 = vst [vmem:[#allocation2 + $0x8] sm:$0xff] %v799
        %816 = vst [vmem:[#allocation2 + $0x10] sm:$0xff] %v800
        %817 = vst [vmem:[#allocation2 + $0x18] sm:$0xff] %v801
        %818 = vst [vmem:[#allocation2 + $0x20] sm:$0xff] %v802
        %819 = vst [vmem:[#allocation2 + $0x28] sm:$0xff] %v803
        %820 = vst [vmem:[#allocation2 + $0x30] sm:$0xff] %v804
        %821 = vst [vmem:[#allocation2 + $0x38] sm:$0xff] %v805
        %822 = vst [vmem:[#allocation2 + $0x40] sm:$0xff] %v806
        %823 = vst [vmem:[#allocation2 + $0x48] sm:$0xff] %v807
        %824 = vst [vmem:[#allocation2 + $0x50] sm:$0xff] %v808
        %825 = vst [vmem:[#allocation2 + $0x58] sm:$0xff] %v809
        %826 = vst [vmem:[#allocation2 + $0x60] sm:$0xff] %v810
        %827 = vst [vmem:[#allocation2 + $0x68] sm:$0xff] %v811
        %828 = vst [vmem:[#allocation2 + $0x70] sm:$0xff] %v812
        %829 = vst [vmem:[#allocation2 + $0x78] sm:$0xff] %v813
        // Predicated region
        $region97: #{tpu_custom_call.1} parent=63 // pred_check
          _
        $region98: #{tpu_custom_call.1} parent=63 // pred_check_branch
          %831 = sbr.rel (%p513) target = $region100
        $region99: #{tpu_custom_call.1} parent=63 // pred_region
          %v832 = vld [vmem:[#allocation2] sm:$0xff]
          %v833 = vld [vmem:[#allocation2 + $0x8] sm:$0xff]
          %v834 = vld [vmem:[#allocation2 + $0x10] sm:$0xff]
          %v835 = vld [vmem:[#allocation2 + $0x18] sm:$0xff]
          %v836 = vld [vmem:[#allocation2 + $0x20] sm:$0xff]
          %v837 = vld [vmem:[#allocation2 + $0x28] sm:$0xff]
          %v838 = vld [vmem:[#allocation2 + $0x30] sm:$0xff]
          %v839 = vld [vmem:[#allocation2 + $0x38] sm:$0xff]
          %v840 = vld [vmem:[#allocation2 + $0x40] sm:$0xff]
          %v841 = vld [vmem:[#allocation2 + $0x48] sm:$0xff]
          %v842 = vld [vmem:[#allocation2 + $0x50] sm:$0xff]
          %v843 = vld [vmem:[#allocation2 + $0x58] sm:$0xff]
          %v844 = vld [vmem:[#allocation2 + $0x60] sm:$0xff]
          %v845 = vld [vmem:[#allocation2 + $0x68] sm:$0xff]
          %v846 = vld [vmem:[#allocation2 + $0x70] sm:$0xff]
          %v847 = vld [vmem:[#allocation2 + $0x78] sm:$0xff]
          %v848 = vld [vmem:[#allocation9] sm:$0xff]
          %v849 = vld [vmem:[#allocation9 + $0x8] sm:$0xff]
          %v850 = vld [vmem:[#allocation9 + $0x10] sm:$0xff]
          %v851 = vld [vmem:[#allocation9 + $0x18] sm:$0xff]
          %v852 = vld [vmem:[#allocation9 + $0x20] sm:$0xff]
          %v853 = vld [vmem:[#allocation9 + $0x28] sm:$0xff]
          %v854 = vld [vmem:[#allocation9 + $0x30] sm:$0xff]
          %v855 = vld [vmem:[#allocation9 + $0x38] sm:$0xff]
          %v856 = vld [vmem:[#allocation9 + $0x40] sm:$0xff]
          %v857 = vld [vmem:[#allocation9 + $0x48] sm:$0xff]
          %v858 = vld [vmem:[#allocation9 + $0x50] sm:$0xff]
          %v859 = vld [vmem:[#allocation9 + $0x58] sm:$0xff]
          %v860 = vld [vmem:[#allocation9 + $0x60] sm:$0xff]
          %v861 = vld [vmem:[#allocation9 + $0x68] sm:$0xff]
          %v862 = vld [vmem:[#allocation9 + $0x70] sm:$0xff]
          %v863 = vld [vmem:[#allocation9 + $0x78] sm:$0xff]
          %v864 = vld [vmem:[%s3] sm:$0x1]
          %v866 = vlaneseq
          %v867 = vshrl.u32 %v866, 7
          %v868 = vsub.s32 0, %v867
          %v869 = vrot.slane %v864, %v868
          %871 = vmatprep.subr.mxu0 0.0
          %872 = vmatpush1.msra.mxu0 %v848
          %873 = vmatprep.subr.mxu0 0.0
          %874 = vmatpush1.msra.mxu0 %v849
          %875 = vmatprep.subr.mxu0 0.0
          %876 = vmatpush1.msra.mxu0 %v850
          %877 = vmatprep.subr.mxu0 0.0
          %878 = vmatpush1.msra.mxu0 %v851
          %879 = vmatprep.subr.mxu0 0.0
          %880 = vmatpush1.msra.mxu0 %v852
          %881 = vmatprep.subr.mxu0 0.0
          %882 = vmatpush1.msra.mxu0 %v853
          %883 = vmatprep.subr.mxu0 0.0
          %884 = vmatpush1.msra.mxu0 %v854
          %885 = vmatprep.subr.mxu0 0.0
          %886 = vmatpush1.msra.mxu0 %v855
          %887 = vmatprep.subr.mxu0 0.0
          %888 = vmatpush1.msra.mxu0 %v856
          %889 = vmatprep.subr.mxu0 0.0
          %890 = vmatpush1.msra.mxu0 %v857
          %891 = vmatprep.subr.mxu0 0.0
          %892 = vmatpush1.msra.mxu0 %v858
          %893 = vmatprep.subr.mxu0 0.0
          %894 = vmatpush1.msra.mxu0 %v859
          %895 = vmatprep.subr.mxu0 0.0
          %896 = vmatpush1.msra.mxu0 %v860
          %897 = vmatprep.subr.mxu0 0.0
          %898 = vmatpush1.msra.mxu0 %v861
          %899 = vmatprep.subr.mxu0 0.0
          %900 = vmatpush1.msra.mxu0 %v862
          %901 = vmatprep.subr.mxu0 0.0
          %902 = vmatpush1.msra.mxu0 %v863
          %903 = vmatprep.subr.mxu0 0.0
          %904 = vmatpush1.msra.mxu0 0.0
          %905 = vmatprep.subr.mxu0 0.0
          %906 = vmatpush1.msra.mxu0 0.0
          %907 = vmatprep.subr.mxu0 0.0
          %908 = vmatpush1.msra.mxu0 0.0
          %909 = vmatprep.subr.mxu0 0.0
          %910 = vmatpush1.msra.mxu0 0.0
          %911 = vmatprep.subr.mxu0 0.0
          %912 = vmatpush1.msra.mxu0 0.0
          %913 = vmatprep.subr.mxu0 0.0
          %914 = vmatpush1.msra.mxu0 0.0
          %915 = vmatprep.subr.mxu0 0.0
          %916 = vmatpush1.msra.mxu0 0.0
          %917 = vmatprep.subr.mxu0 0.0
          %918 = vmatpush1.msra.mxu0 0.0
          %919 = vmatprep.subr.mxu0 0.0
          %920 = vmatpush1.msra.mxu0 0.0
          %921 = vmatprep.subr.mxu0 0.0
          %922 = vmatpush1.msra.mxu0 0.0
          %923 = vmatprep.subr.mxu0 0.0
          %924 = vmatpush1.msra.mxu0 0.0
          %925 = vmatprep.subr.mxu0 0.0
          %926 = vmatpush1.msra.mxu0 0.0
          %927 = vmatprep.subr.mxu0 0.0
          %928 = vmatpush1.msra.mxu0 0.0
          %929 = vmatprep.subr.mxu0 0.0
          %930 = vmatpush1.msra.mxu0 0.0
          %931 = vmatprep.subr.mxu0 0.0
          %932 = vmatpush1.msra.mxu0 0.0
          %933 = vmatprep.subr.mxu0 0.0
          %934 = vmatpush1.msra.mxu0 0.0
          %935 = vmatprep.mubr.f32.mxu0 0.0
          %936 = vmatmul.mubr.f32.gmra.mrb[0].mxu0 %v832
          %v937 = vpop.f32.mrb[0].mxu0
          %v938 = vadd.f32 %v869, %v937
          %v939 = vpop.f32.mrb[0].mxu0
          %940 = vmatprep.mubr.f32.mxu0 0.0
          %941 = vmatmul.mubr.f32.gmra.mrb[0].mxu0 %v833
          %v942 = vpop.f32.mrb[0].mxu0
          %v943 = vadd.f32 %v869, %v942
          %v944 = vpop.f32.mrb[0].mxu0
          %945 = vmatprep.mubr.f32.mxu0 0.0
          %946 = vmatmul.mubr.f32.gmra.mrb[0].mxu0 %v834
          %v947 = vpop.f32.mrb[0].mxu0
          %v948 = vadd.f32 %v869, %v947
          %v949 = vpop.f32.mrb[0].mxu0
          %950 = vmatprep.mubr.f32.mxu0 0.0
          %951 = vmatmul.mubr.f32.gmra.mrb[0].mxu0 %v835
          %v952 = vpop.f32.mrb[0].mxu0
          %v953 = vadd.f32 %v869, %v952
          %v954 = vpop.f32.mrb[0].mxu0
          %955 = vmatprep.mubr.f32.mxu0 0.0
          %956 = vmatmul.mubr.f32.gmra.mrb[0].mxu0 %v836
          %v957 = vpop.f32.mrb[0].mxu0
          %v958 = vadd.f32 %v869, %v957
          %v959 = vpop.f32.mrb[0].mxu0
          %960 = vmatprep.mubr.f32.mxu0 0.0
          %961 = vmatmul.mubr.f32.gmra.mrb[0].mxu0 %v837
          %v962 = vpop.f32.mrb[0].mxu0
          %v963 = vadd.f32 %v869, %v962
          %v964 = vpop.f32.mrb[0].mxu0
          %965 = vmatprep.mubr.f32.mxu0 0.0
          %966 = vmatmul.mubr.f32.gmra.mrb[0].mxu0 %v838
          %v967 = vpop.f32.mrb[0].mxu0
          %v968 = vadd.f32 %v869, %v967
          %v969 = vpop.f32.mrb[0].mxu0
          %970 = vmatprep.mubr.f32.mxu0 0.0
          %971 = vmatmul.mubr.f32.gmra.mrb[0].mxu0 %v839
          %v972 = vpop.f32.mrb[0].mxu0
          %v973 = vadd.f32 %v869, %v972
          %v974 = vpop.f32.mrb[0].mxu0
          %975 = vmatprep.mubr.f32.mxu0 0.0
          %976 = vmatmul.mubr.f32.gmra.mrb[0].mxu0 %v840
          %v977 = vpop.f32.mrb[0].mxu0
          %v978 = vadd.f32 %v869, %v977
          %v979 = vpop.f32.mrb[0].mxu0
          %980 = vmatprep.mubr.f32.mxu0 0.0
          %981 = vmatmul.mubr.f32.gmra.mrb[0].mxu0 %v841
          %v982 = vpop.f32.mrb[0].mxu0
          %v983 = vadd.f32 %v869, %v982
          %v984 = vpop.f32.mrb[0].mxu0
          %985 = vmatprep.mubr.f32.mxu0 0.0
          %986 = vmatmul.mubr.f32.gmra.mrb[0].mxu0 %v842
          %v987 = vpop.f32.mrb[0].mxu0
          %v988 = vadd.f32 %v869, %v987
          %v989 = vpop.f32.mrb[0].mxu0
          %990 = vmatprep.mubr.f32.mxu0 0.0
          %991 = vmatmul.mubr.f32.gmra.mrb[0].mxu0 %v843
          %v992 = vpop.f32.mrb[0].mxu0
          %v993 = vadd.f32 %v869, %v992
          %v994 = vpop.f32.mrb[0].mxu0
          %995 = vmatprep.mubr.f32.mxu0 0.0
          %996 = vmatmul.mubr.f32.gmra.mrb[0].mxu0 %v844
          %v997 = vpop.f32.mrb[0].mxu0
          %v998 = vadd.f32 %v869, %v997
          %v999 = vpop.f32.mrb[0].mxu0
          %1000 = vmatprep.mubr.f32.mxu0 0.0
          %1001 = vmatmul.mubr.f32.gmra.mrb[0].mxu0 %v845
          %v1002 = vpop.f32.mrb[0].mxu0
          %v1003 = vadd.f32 %v869, %v1002
          %v1004 = vpop.f32.mrb[0].mxu0
          %1005 = vmatprep.mubr.f32.mxu0 0.0
          %1006 = vmatmul.mubr.f32.gmra.mrb[0].mxu0 %v846
          %v1007 = vpop.f32.mrb[0].mxu0
          %v1008 = vadd.f32 %v869, %v1007
          %v1009 = vpop.f32.mrb[0].mxu0
          %1010 = vmatprep.mubr.f32.mxu0 0.0
          %1011 = vmatmul.mubr.f32.gmra.mrb[0].mxu0 %v847
          %v1012 = vpop.f32.mrb[0].mxu0
          %v1013 = vadd.f32 %v869, %v1012
          %v1014 = vpop.f32.mrb[0].mxu0
          %1015 = vdwg.mxu0
          %v1016 = vmax.f32 %v938, 0.0
          %v1017 = vmax.f32 %v943, 0.0
          %v1018 = vmax.f32 %v948, 0.0
          %v1019 = vmax.f32 %v953, 0.0
          %v1020 = vmax.f32 %v958, 0.0
          %v1021 = vmax.f32 %v963, 0.0
          %v1022 = vmax.f32 %v968, 0.0
          %v1023 = vmax.f32 %v973, 0.0
          %v1024 = vmax.f32 %v978, 0.0
          %v1025 = vmax.f32 %v983, 0.0
          %v1026 = vmax.f32 %v988, 0.0
          %v1027 = vmax.f32 %v993, 0.0
          %v1028 = vmax.f32 %v998, 0.0
          %v1029 = vmax.f32 %v1003, 0.0
          %v1030 = vmax.f32 %v1008, 0.0
          %v1031 = vmax.f32 %v1013, 0.0
          %v1032 = vpack.c.bf16 %v1017, %v1016
          %v1033 = vpack.c.bf16 %v1019, %v1018
          %v1034 = vpack.c.bf16 %v1021, %v1020
          %v1035 = vpack.c.bf16 %v1023, %v1022
          %v1036 = vpack.c.bf16 %v1025, %v1024
          %v1037 = vpack.c.bf16 %v1027, %v1026
          %v1038 = vpack.c.bf16 %v1029, %v1028
          %v1039 = vpack.c.bf16 %v1031, %v1030
          %1040 = vst [vmem:[#allocation3] sm:$0xff] %v1032
          %1041 = vst [vmem:[#allocation3 + $0x8] sm:$0xff] %v1033
          %1042 = vst [vmem:[#allocation3 + $0x10] sm:$0xff] %v1034
          %1043 = vst [vmem:[#allocation3 + $0x18] sm:$0xff] %v1035
          %1044 = vst [vmem:[#allocation3 + $0x20] sm:$0xff] %v1036
          %1045 = vst [vmem:[#allocation3 + $0x28] sm:$0xff] %v1037
          %1046 = vst [vmem:[#allocation3 + $0x30] sm:$0xff] %v1038
          %1047 = vst [vmem:[#allocation3 + $0x38] sm:$0xff] %v1039
        $region100: #{tpu_custom_call.1} parent=63 // pred_fallthru
          _
        %p1048 = scmp.eq.s32.totalorder %s35, 1
        %p1049 = pnand %p1048, %p512
        %p1050 = pneg %p1049
        // Predicated region
        $region101: #{tpu_custom_call.1} parent=63 // pred_check
          _
        $region102: #{tpu_custom_call.1} parent=63 // pred_check_branch
          %1052 = sbr.rel (%p1049) target = $region104
        $region103: #{tpu_custom_call.1} parent=63 // pred_region
          %v1053 = vld [vmem:[#allocation2] sm:$0xff]
          %v1054 = vld [vmem:[#allocation2 + $0x8] sm:$0xff]
          %v1055 = vld [vmem:[#allocation2 + $0x10] sm:$0xff]
          %v1056 = vld [vmem:[#allocation2 + $0x18] sm:$0xff]
          %v1057 = vld [vmem:[#allocation2 + $0x20] sm:$0xff]
          %v1058 = vld [vmem:[#allocation2 + $0x28] sm:$0xff]
          %v1059 = vld [vmem:[#allocation2 + $0x30] sm:$0xff]
          %v1060 = vld [vmem:[#allocation2 + $0x38] sm:$0xff]
          %v1061 = vld [vmem:[#allocation2 + $0x40] sm:$0xff]
          %v1062 = vld [vmem:[#allocation2 + $0x48] sm:$0xff]
          %v1063 = vld [vmem:[#allocation2 + $0x50] sm:$0xff]
          %v1064 = vld [vmem:[#allocation2 + $0x58] sm:$0xff]
          %v1065 = vld [vmem:[#allocation2 + $0x60] sm:$0xff]
          %v1066 = vld [vmem:[#allocation2 + $0x68] sm:$0xff]
          %v1067 = vld [vmem:[#allocation2 + $0x70] sm:$0xff]
          %v1068 = vld [vmem:[#allocation2 + $0x78] sm:$0xff]
          %v1069 = vld [vmem:[#allocation10] sm:$0xff]
          %v1070 = vld [vmem:[#allocation10 + $0x8] sm:$0xff]
          %v1071 = vld [vmem:[#allocation10 + $0x10] sm:$0xff]
          %v1072 = vld [vmem:[#allocation10 + $0x18] sm:$0xff]
          %v1073 = vld [vmem:[#allocation10 + $0x20] sm:$0xff]
          %v1074 = vld [vmem:[#allocation10 + $0x28] sm:$0xff]
          %v1075 = vld [vmem:[#allocation10 + $0x30] sm:$0xff]
          %v1076 = vld [vmem:[#allocation10 + $0x38] sm:$0xff]
          %v1077 = vld [vmem:[#allocation10 + $0x40] sm:$0xff]
          %v1078 = vld [vmem:[#allocation10 + $0x48] sm:$0xff]
          %v1079 = vld [vmem:[#allocation10 + $0x50] sm:$0xff]
          %v1080 = vld [vmem:[#allocation10 + $0x58] sm:$0xff]
          %v1081 = vld [vmem:[#allocation10 + $0x60] sm:$0xff]
          %v1082 = vld [vmem:[#allocation10 + $0x68] sm:$0xff]
          %v1083 = vld [vmem:[#allocation10 + $0x70] sm:$0xff]
          %v1084 = vld [vmem:[#allocation10 + $0x78] sm:$0xff]
          %v1085 = vld [vmem:[%s5] sm:$0x1]
          %v1087 = vlaneseq
          %v1088 = vshrl.u32 %v1087, 7
          %v1089 = vsub.s32 0, %v1088
          %v1090 = vrot.slane %v1085, %v1089
          %1092 = vmatprep.subr.mxu0 0.0
          %1093 = vmatpush1.msra.mxu0 %v1069
          %1094 = vmatprep.subr.mxu0 0.0
          %1095 = vmatpush1.msra.mxu0 %v1070
          %1096 = vmatprep.subr.mxu0 0.0
          %1097 = vmatpush1.msra.mxu0 %v1071
          %1098 = vmatprep.subr.mxu0 0.0
          %1099 = vmatpush1.msra.mxu0 %v1072
          %1100 = vmatprep.subr.mxu0 0.0
          %1101 = vmatpush1.msra.mxu0 %v1073
          %1102 = vmatprep.subr.mxu0 0.0
          %1103 = vmatpush1.msra.mxu0 %v1074
          %1104 = vmatprep.subr.mxu0 0.0
          %1105 = vmatpush1.msra.mxu0 %v1075
          %1106 = vmatprep.subr.mxu0 0.0
          %1107 = vmatpush1.msra.mxu0 %v1076
          %1108 = vmatprep.subr.mxu0 0.0
          %1109 = vmatpush1.msra.mxu0 %v1077
          %1110 = vmatprep.subr.mxu0 0.0
          %1111 = vmatpush1.msra.mxu0 %v1078
          %1112 = vmatprep.subr.mxu0 0.0
          %1113 = vmatpush1.msra.mxu0 %v1079
          %1114 = vmatprep.subr.mxu0 0.0
          %1115 = vmatpush1.msra.mxu0 %v1080
          %1116 = vmatprep.subr.mxu0 0.0
          %1117 = vmatpush1.msra.mxu0 %v1081
          %1118 = vmatprep.subr.mxu0 0.0
          %1119 = vmatpush1.msra.mxu0 %v1082
          %1120 = vmatprep.subr.mxu0 0.0
          %1121 = vmatpush1.msra.mxu0 %v1083
          %1122 = vmatprep.subr.mxu0 0.0
          %1123 = vmatpush1.msra.mxu0 %v1084
          %1124 = vmatprep.subr.mxu0 0.0
          %1125 = vmatpush1.msra.mxu0 0.0
          %1126 = vmatprep.subr.mxu0 0.0
          %1127 = vmatpush1.msra.mxu0 0.0
          %1128 = vmatprep.subr.mxu0 0.0
          %1129 = vmatpush1.msra.mxu0 0.0
          %1130 = vmatprep.subr.mxu0 0.0
          %1131 = vmatpush1.msra.mxu0 0.0
          %1132 = vmatprep.subr.mxu0 0.0
          %1133 = vmatpush1.msra.mxu0 0.0
          %1134 = vmatprep.subr.mxu0 0.0
          %1135 = vmatpush1.msra.mxu0 0.0
          %1136 = vmatprep.subr.mxu0 0.0
          %1137 = vmatpush1.msra.mxu0 0.0
          %1138 = vmatprep.subr.mxu0 0.0
          %1139 = vmatpush1.msra.mxu0 0.0
          %1140 = vmatprep.subr.mxu0 0.0
          %1141 = vmatpush1.msra.mxu0 0.0
          %1142 = vmatprep.subr.mxu0 0.0
          %1143 = vmatpush1.msra.mxu0 0.0
          %1144 = vmatprep.subr.mxu0 0.0
          %1145 = vmatpush1.msra.mxu0 0.0
          %1146 = vmatprep.subr.mxu0 0.0
          %1147 = vmatpush1.msra.mxu0 0.0
          %1148 = vmatprep.subr.mxu0 0.0
          %1149 = vmatpush1.msra.mxu0 0.0
          %1150 = vmatprep.subr.mxu0 0.0
          %1151 = vmatpush1.msra.mxu0 0.0
          %1152 = vmatprep.subr.mxu0 0.0
          %1153 = vmatpush1.msra.mxu0 0.0
          %1154 = vmatprep.subr.mxu0 0.0
          %1155 = vmatpush1.msra.mxu0 0.0
          %1156 = vmatprep.mubr.f32.mxu0 0.0
          %1157 = vmatmul.mubr.f32.gmra.mrb[0].mxu0 %v1053
          %v1158 = vpop.f32.mrb[0].mxu0
          %v1159 = vadd.f32 %v1090, %v1158
          %v1160 = vpop.f32.mrb[0].mxu0
          %1161 = vmatprep.mubr.f32.mxu0 0.0
          %1162 = vmatmul.mubr.f32.gmra.mrb[0].mxu0 %v1054
          %v1163 = vpop.f32.mrb[0].mxu0
          %v1164 = vadd.f32 %v1090, %v1163
          %v1165 = vpop.f32.mrb[0].mxu0
          %1166 = vmatprep.mubr.f32.mxu0 0.0
          %1167 = vmatmul.mubr.f32.gmra.mrb[0].mxu0 %v1055
          %v1168 = vpop.f32.mrb[0].mxu0
          %v1169 = vadd.f32 %v1090, %v1168
          %v1170 = vpop.f32.mrb[0].mxu0
          %1171 = vmatprep.mubr.f32.mxu0 0.0
          %1172 = vmatmul.mubr.f32.gmra.mrb[0].mxu0 %v1056
          %v1173 = vpop.f32.mrb[0].mxu0
          %v1174 = vadd.f32 %v1090, %v1173
          %v1175 = vpop.f32.mrb[0].mxu0
          %1176 = vmatprep.mubr.f32.mxu0 0.0
          %1177 = vmatmul.mubr.f32.gmra.mrb[0].mxu0 %v1057
          %v1178 = vpop.f32.mrb[0].mxu0
          %v1179 = vadd.f32 %v1090, %v1178
          %v1180 = vpop.f32.mrb[0].mxu0
          %1181 = vmatprep.mubr.f32.mxu0 0.0
          %1182 = vmatmul.mubr.f32.gmra.mrb[0].mxu0 %v1058
          %v1183 = vpop.f32.mrb[0].mxu0
          %v1184 = vadd.f32 %v1090, %v1183
          %v1185 = vpop.f32.mrb[0].mxu0
          %1186 = vmatprep.mubr.f32.mxu0 0.0
          %1187 = vmatmul.mubr.f32.gmra.mrb[0].mxu0 %v1059
          %v1188 = vpop.f32.mrb[0].mxu0
          %v1189 = vadd.f32 %v1090, %v1188
          %v1190 = vpop.f32.mrb[0].mxu0
          %1191 = vmatprep.mubr.f32.mxu0 0.0
          %1192 = vmatmul.mubr.f32.gmra.mrb[0].mxu0 %v1060
          %v1193 = vpop.f32.mrb[0].mxu0
          %v1194 = vadd.f32 %v1090, %v1193
          %v1195 = vpop.f32.mrb[0].mxu0
          %1196 = vmatprep.mubr.f32.mxu0 0.0
          %1197 = vmatmul.mubr.f32.gmra.mrb[0].mxu0 %v1061
          %v1198 = vpop.f32.mrb[0].mxu0
          %v1199 = vadd.f32 %v1090, %v1198
          %v1200 = vpop.f32.mrb[0].mxu0
          %1201 = vmatprep.mubr.f32.mxu0 0.0
          %1202 = vmatmul.mubr.f32.gmra.mrb[0].mxu0 %v1062
          %v1203 = vpop.f32.mrb[0].mxu0
          %v1204 = vadd.f32 %v1090, %v1203
          %v1205 = vpop.f32.mrb[0].mxu0
          %1206 = vmatprep.mubr.f32.mxu0 0.0
          %1207 = vmatmul.mubr.f32.gmra.mrb[0].mxu0 %v1063
          %v1208 = vpop.f32.mrb[0].mxu0
          %v1209 = vadd.f32 %v1090, %v1208
          %v1210 = vpop.f32.mrb[0].mxu0
          %1211 = vmatprep.mubr.f32.mxu0 0.0
          %1212 = vmatmul.mubr.f32.gmra.mrb[0].mxu0 %v1064
          %v1213 = vpop.f32.mrb[0].mxu0
          %v1214 = vadd.f32 %v1090, %v1213
          %v1215 = vpop.f32.mrb[0].mxu0
          %1216 = vmatprep.mubr.f32.mxu0 0.0
          %1217 = vmatmul.mubr.f32.gmra.mrb[0].mxu0 %v1065
          %v1218 = vpop.f32.mrb[0].mxu0
          %v1219 = vadd.f32 %v1090, %v1218
          %v1220 = vpop.f32.mrb[0].mxu0
          %1221 = vmatprep.mubr.f32.mxu0 0.0
          %1222 = vmatmul.mubr.f32.gmra.mrb[0].mxu0 %v1066
          %v1223 = vpop.f32.mrb[0].mxu0
          %v1224 = vadd.f32 %v1090, %v1223
          %v1225 = vpop.f32.mrb[0].mxu0
          %1226 = vmatprep.mubr.f32.mxu0 0.0
          %1227 = vmatmul.mubr.f32.gmra.mrb[0].mxu0 %v1067
          %v1228 = vpop.f32.mrb[0].mxu0
          %v1229 = vadd.f32 %v1090, %v1228
          %v1230 = vpop.f32.mrb[0].mxu0
          %1231 = vmatprep.mubr.f32.mxu0 0.0
          %1232 = vmatmul.mubr.f32.gmra.mrb[0].mxu0 %v1068
          %v1233 = vpop.f32.mrb[0].mxu0
          %v1234 = vadd.f32 %v1090, %v1233
          %v1235 = vpop.f32.mrb[0].mxu0
          %1236 = vdwg.mxu0
          %1237 = vst [vmem:[#allocation15] sm:$0xff] %v1159
          %1238 = vst [vmem:[#allocation15 + $0x8] sm:$0xff] %v1164
          %1239 = vst [vmem:[#allocation15 + $0x10] sm:$0xff] %v1169
          %1240 = vst [vmem:[#allocation15 + $0x18] sm:$0xff] %v1174
          %1241 = vst [vmem:[#allocation15 + $0x20] sm:$0xff] %v1179
          %1242 = vst [vmem:[#allocation15 + $0x28] sm:$0xff] %v1184
          %1243 = vst [vmem:[#allocation15 + $0x30] sm:$0xff] %v1189
          %1244 = vst [vmem:[#allocation15 + $0x38] sm:$0xff] %v1194
          %1245 = vst [vmem:[#allocation15 + $0x40] sm:$0xff] %v1199
          %1246 = vst [vmem:[#allocation15 + $0x48] sm:$0xff] %v1204
          %1247 = vst [vmem:[#allocation15 + $0x50] sm:$0xff] %v1209
          %1248 = vst [vmem:[#allocation15 + $0x58] sm:$0xff] %v1214
          %1249 = vst [vmem:[#allocation15 + $0x60] sm:$0xff] %v1219
          %1250 = vst [vmem:[#allocation15 + $0x68] sm:$0xff] %v1224
          %1251 = vst [vmem:[#allocation15 + $0x70] sm:$0xff] %v1229
          %1252 = vst [vmem:[#allocation15 + $0x78] sm:$0xff] %v1234
          %v1253 = vld [vmem:[%s6] sm:$0xff]
          %1254 = vmatprep.subr.mxu0 0.0
          %1255 = vmatpush1.msra.mxu0 %v1159
          %1256 = vmatprep.subr.mxu0 0.0
          %1257 = vmatpush1.msra.mxu0 %v1164
          %1258 = vmatprep.subr.mxu0 0.0
          %1259 = vmatpush1.msra.mxu0 %v1169
          %1260 = vmatprep.subr.mxu0 0.0
          %1261 = vmatpush1.msra.mxu0 %v1174
          %1262 = vmatprep.subr.mxu0 0.0
          %1263 = vmatpush1.msra.mxu0 %v1179
          %1264 = vmatprep.subr.mxu0 0.0
          %1265 = vmatpush1.msra.mxu0 %v1184
          %1266 = vmatprep.subr.mxu0 0.0
          %1267 = vmatpush1.msra.mxu0 %v1189
          %1268 = vmatprep.subr.mxu0 0.0
          %1269 = vmatpush1.msra.mxu0 %v1194
          %1270 = vmatprep.subr.mxu0 0.0
          %1271 = vmatpush1.msra.mxu0 %v1199
          %1272 = vmatprep.subr.mxu0 0.0
          %1273 = vmatpush1.msra.mxu0 %v1204
          %1274 = vmatprep.subr.mxu0 0.0
          %1275 = vmatpush1.msra.mxu0 %v1209
          %1276 = vmatprep.subr.mxu0 0.0
          %1277 = vmatpush1.msra.mxu0 %v1214
          %1278 = vmatprep.subr.mxu0 0.0
          %1279 = vmatpush1.msra.mxu0 %v1219
          %1280 = vmatprep.subr.mxu0 0.0
          %1281 = vmatpush1.msra.mxu0 %v1224
          %1282 = vmatprep.subr.mxu0 0.0
          %1283 = vmatpush1.msra.mxu0 %v1229
          %1284 = vmatprep.subr.mxu0 0.0
          %1285 = vmatpush1.msra.mxu0 %v1234
          %1286 = vmatprep.subr.mxu0 0.0
          %1287 = vmatpush1.msra.mxu0 0.0
          %1288 = vmatprep.subr.mxu0 0.0
          %1289 = vmatpush1.msra.mxu0 0.0
          %1290 = vmatprep.subr.mxu0 0.0
          %1291 = vmatpush1.msra.mxu0 0.0
          %1292 = vmatprep.subr.mxu0 0.0
          %1293 = vmatpush1.msra.mxu0 0.0
          %1294 = vmatprep.subr.mxu0 0.0
          %1295 = vmatpush1.msra.mxu0 0.0
          %1296 = vmatprep.subr.mxu0 0.0
          %1297 = vmatpush1.msra.mxu0 0.0
          %1298 = vmatprep.subr.mxu0 0.0
          %1299 = vmatpush1.msra.mxu0 0.0
          %1300 = vmatprep.subr.mxu0 0.0
          %1301 = vmatpush1.msra.mxu0 0.0
          %1302 = vmatprep.subr.mxu0 0.0
          %1303 = vmatpush1.msra.mxu0 0.0
          %1304 = vmatprep.subr.mxu0 0.0
          %1305 = vmatpush1.msra.mxu0 0.0
          %1306 = vmatprep.subr.mxu0 0.0
          %1307 = vmatpush1.msra.mxu0 0.0
          %1308 = vmatprep.subr.mxu0 0.0
          %1309 = vmatpush1.msra.mxu0 0.0
          %1310 = vmatprep.subr.mxu0 0.0
          %1311 = vmatpush1.msra.mxu0 0.0
          %1312 = vmatprep.subr.mxu0 0.0
          %1313 = vmatpush1.msra.mxu0 0.0
          %1314 = vmatprep.subr.mxu0 0.0
          %1315 = vmatpush1.msra.mxu0 0.0
          %1316 = vmatprep.subr.mxu0 0.0
          %1317 = vmatpush1.msra.mxu0 0.0
          %1318 = vmatprep.mubr.f32.mxu0 0.0
          %1319 = vmatmul.mubr.f32.gmra.mrb[0].mxu0 %v1253
          %v1320 = vpop.f32.mrb[0].mxu0
          %v1321 = vadd.f32 0.0, %v1320
          %v1322 = vpop.f32.mrb[0].mxu0
          %1323 = vdwg.mxu0
          %1324 = vst [vmem:[#allocation16] sm:$0xff] %v1321
          %v1325 = vld [vmem:[#allocation12] sm:$0xff]
          %v1326 = vld [vmem:[#allocation12 + $0x8] sm:$0xff]
          %v1327 = vld [vmem:[#allocation12 + $0x10] sm:$0xff]
          %v1328 = vld [vmem:[#allocation12 + $0x18] sm:$0xff]
          %v1329 = vld [vmem:[#allocation12 + $0x20] sm:$0xff]
          %v1330 = vld [vmem:[#allocation12 + $0x28] sm:$0xff]
          %v1331 = vld [vmem:[#allocation12 + $0x30] sm:$0xff]
          %v1332 = vld [vmem:[#allocation12 + $0x38] sm:$0xff]
          %v1333 = vld [vmem:[#allocation12 + $0x40] sm:$0xff]
          %v1334 = vld [vmem:[#allocation12 + $0x48] sm:$0xff]
          %v1335 = vld [vmem:[#allocation12 + $0x50] sm:$0xff]
          %v1336 = vld [vmem:[#allocation12 + $0x58] sm:$0xff]
          %v1337 = vld [vmem:[#allocation12 + $0x60] sm:$0xff]
          %v1338 = vld [vmem:[#allocation12 + $0x68] sm:$0xff]
          %v1339 = vld [vmem:[#allocation12 + $0x70] sm:$0xff]
          %v1340 = vld [vmem:[#allocation12 + $0x78] sm:$0xff]
          %v1341 = vld [vmem:[%s8] sm:$0x1]
          %v1343 = vlaneseq
          %v1344 = vshrl.u32 %v1343, 7
          %v1345 = vsub.s32 0, %v1344
          %v1346 = vrot.slane %v1341, %v1345
          %1348 = vmatprep.subr.mxu0 0.0
          %1349 = vmatpush1.msra.mxu0 %v1325
          %1350 = vmatprep.subr.mxu0 0.0
          %1351 = vmatpush1.msra.mxu0 %v1326
          %1352 = vmatprep.subr.mxu0 0.0
          %1353 = vmatpush1.msra.mxu0 %v1327
          %1354 = vmatprep.subr.mxu0 0.0
          %1355 = vmatpush1.msra.mxu0 %v1328
          %1356 = vmatprep.subr.mxu0 0.0
          %1357 = vmatpush1.msra.mxu0 %v1329
          %1358 = vmatprep.subr.mxu0 0.0
          %1359 = vmatpush1.msra.mxu0 %v1330
          %1360 = vmatprep.subr.mxu0 0.0
          %1361 = vmatpush1.msra.mxu0 %v1331
          %1362 = vmatprep.subr.mxu0 0.0
          %1363 = vmatpush1.msra.mxu0 %v1332
          %1364 = vmatprep.subr.mxu0 0.0
          %1365 = vmatpush1.msra.mxu0 %v1333
          %1366 = vmatprep.subr.mxu0 0.0
          %1367 = vmatpush1.msra.mxu0 %v1334
          %1368 = vmatprep.subr.mxu0 0.0
          %1369 = vmatpush1.msra.mxu0 %v1335
          %1370 = vmatprep.subr.mxu0 0.0
          %1371 = vmatpush1.msra.mxu0 %v1336
          %1372 = vmatprep.subr.mxu0 0.0
          %1373 = vmatpush1.msra.mxu0 %v1337
          %1374 = vmatprep.subr.mxu0 0.0
          %1375 = vmatpush1.msra.mxu0 %v1338
          %1376 = vmatprep.subr.mxu0 0.0
          %1377 = vmatpush1.msra.mxu0 %v1339
          %1378 = vmatprep.subr.mxu0 0.0
          %1379 = vmatpush1.msra.mxu0 %v1340
          %1380 = vmatprep.subr.mxu0 0.0
          %1381 = vmatpush1.msra.mxu0 0.0
          %1382 = vmatprep.subr.mxu0 0.0
          %1383 = vmatpush1.msra.mxu0 0.0
          %1384 = vmatprep.subr.mxu0 0.0
          %1385 = vmatpush1.msra.mxu0 0.0
          %1386 = vmatprep.subr.mxu0 0.0
          %1387 = vmatpush1.msra.mxu0 0.0
          %1388 = vmatprep.subr.mxu0 0.0
          %1389 = vmatpush1.msra.mxu0 0.0
          %1390 = vmatprep.subr.mxu0 0.0
          %1391 = vmatpush1.msra.mxu0 0.0
          %1392 = vmatprep.subr.mxu0 0.0
          %1393 = vmatpush1.msra.mxu0 0.0
          %1394 = vmatprep.subr.mxu0 0.0
          %1395 = vmatpush1.msra.mxu0 0.0
          %1396 = vmatprep.subr.mxu0 0.0
          %1397 = vmatpush1.msra.mxu0 0.0
          %1398 = vmatprep.subr.mxu0 0.0
          %1399 = vmatpush1.msra.mxu0 0.0
          %1400 = vmatprep.subr.mxu0 0.0
          %1401 = vmatpush1.msra.mxu0 0.0
          %1402 = vmatprep.subr.mxu0 0.0
          %1403 = vmatpush1.msra.mxu0 0.0
          %1404 = vmatprep.subr.mxu0 0.0
          %1405 = vmatpush1.msra.mxu0 0.0
          %1406 = vmatprep.subr.mxu0 0.0
          %1407 = vmatpush1.msra.mxu0 0.0
          %1408 = vmatprep.subr.mxu0 0.0
          %1409 = vmatpush1.msra.mxu0 0.0
          %1410 = vmatprep.subr.mxu0 0.0
          %1411 = vmatpush1.msra.mxu0 0.0
          %1412 = vmatprep.mubr.f32.mxu0 0.0
          %1413 = vmatmul.mubr.f32.gmra.mrb[0].mxu0 %v1321
          %v1414 = vpop.f32.mrb[0].mxu0
          %v1415 = vadd.f32 %v1346, %v1414
          %v1416 = vpop.f32.mrb[0].mxu0
          %1417 = vdwg.mxu0
          %v1418 = vmax.f32 %v1415, 0.0
          %v1419 = vld [vmem:[#allocation13] sm:$0xff]
          %v1420 = vld [vmem:[#allocation13 + $0x8] sm:$0xff]
          %v1421 = vld [vmem:[#allocation13 + $0x10] sm:$0xff]
          %v1422 = vld [vmem:[#allocation13 + $0x18] sm:$0xff]
          %v1423 = vld [vmem:[#allocation13 + $0x20] sm:$0xff]
          %v1424 = vld [vmem:[#allocation13 + $0x28] sm:$0xff]
          %v1425 = vld [vmem:[#allocation13 + $0x30] sm:$0xff]
          %v1426 = vld [vmem:[#allocation13 + $0x38] sm:$0xff]
          %v1427 = vld [vmem:[#allocation13 + $0x40] sm:$0xff]
          %v1428 = vld [vmem:[#allocation13 + $0x48] sm:$0xff]
          %v1429 = vld [vmem:[#allocation13 + $0x50] sm:$0xff]
          %v1430 = vld [vmem:[#allocation13 + $0x58] sm:$0xff]
          %v1431 = vld [vmem:[#allocation13 + $0x60] sm:$0xff]
          %v1432 = vld [vmem:[#allocation13 + $0x68] sm:$0xff]
          %v1433 = vld [vmem:[#allocation13 + $0x70] sm:$0xff]
          %v1434 = vld [vmem:[#allocation13 + $0x78] sm:$0xff]
          %v1435 = vld [vmem:[%s10] sm:$0x1]
          %v1437 = vlaneseq
          %v1438 = vshrl.u32 %v1437, 7
          %v1439 = vsub.s32 0, %v1438
          %v1440 = vrot.slane %v1435, %v1439
          %1442 = vmatprep.subr.mxu0 0.0
          %1443 = vmatpush1.msra.mxu0 %v1419
          %1444 = vmatprep.subr.mxu0 0.0
          %1445 = vmatpush1.msra.mxu0 %v1420
          %1446 = vmatprep.subr.mxu0 0.0
          %1447 = vmatpush1.msra.mxu0 %v1421
          %1448 = vmatprep.subr.mxu0 0.0
          %1449 = vmatpush1.msra.mxu0 %v1422
          %1450 = vmatprep.subr.mxu0 0.0
          %1451 = vmatpush1.msra.mxu0 %v1423
          %1452 = vmatprep.subr.mxu0 0.0
          %1453 = vmatpush1.msra.mxu0 %v1424
          %1454 = vmatprep.subr.mxu0 0.0
          %1455 = vmatpush1.msra.mxu0 %v1425
          %1456 = vmatprep.subr.mxu0 0.0
          %1457 = vmatpush1.msra.mxu0 %v1426
          %1458 = vmatprep.subr.mxu0 0.0
          %1459 = vmatpush1.msra.mxu0 %v1427
          %1460 = vmatprep.subr.mxu0 0.0
          %1461 = vmatpush1.msra.mxu0 %v1428
          %1462 = vmatprep.subr.mxu0 0.0
          %1463 = vmatpush1.msra.mxu0 %v1429
          %1464 = vmatprep.subr.mxu0 0.0
          %1465 = vmatpush1.msra.mxu0 %v1430
          %1466 = vmatprep.subr.mxu0 0.0
          %1467 = vmatpush1.msra.mxu0 %v1431
          %1468 = vmatprep.subr.mxu0 0.0
          %1469 = vmatpush1.msra.mxu0 %v1432
          %1470 = vmatprep.subr.mxu0 0.0
          %1471 = vmatpush1.msra.mxu0 %v1433
          %1472 = vmatprep.subr.mxu0 0.0
          %1473 = vmatpush1.msra.mxu0 %v1434
          %1474 = vmatprep.subr.mxu0 0.0
          %1475 = vmatpush1.msra.mxu0 0.0
          %1476 = vmatprep.subr.mxu0 0.0
          %1477 = vmatpush1.msra.mxu0 0.0
          %1478 = vmatprep.subr.mxu0 0.0
          %1479 = vmatpush1.msra.mxu0 0.0
          %1480 = vmatprep.subr.mxu0 0.0
          %1481 = vmatpush1.msra.mxu0 0.0
          %1482 = vmatprep.subr.mxu0 0.0
          %1483 = vmatpush1.msra.mxu0 0.0
          %1484 = vmatprep.subr.mxu0 0.0
          %1485 = vmatpush1.msra.mxu0 0.0
          %1486 = vmatprep.subr.mxu0 0.0
          %1487 = vmatpush1.msra.mxu0 0.0
          %1488 = vmatprep.subr.mxu0 0.0
          %1489 = vmatpush1.msra.mxu0 0.0
          %1490 = vmatprep.subr.mxu0 0.0
          %1491 = vmatpush1.msra.mxu0 0.0
          %1492 = vmatprep.subr.mxu0 0.0
          %1493 = vmatpush1.msra.mxu0 0.0
          %1494 = vmatprep.subr.mxu0 0.0
          %1495 = vmatpush1.msra.mxu0 0.0
          %1496 = vmatprep.subr.mxu0 0.0
          %1497 = vmatpush1.msra.mxu0 0.0
          %1498 = vmatprep.subr.mxu0 0.0
          %1499 = vmatpush1.msra.mxu0 0.0
          %1500 = vmatprep.subr.mxu0 0.0
          %1501 = vmatpush1.msra.mxu0 0.0
          %1502 = vmatprep.subr.mxu0 0.0
          %1503 = vmatpush1.msra.mxu0 0.0
          %1504 = vmatprep.subr.mxu0 0.0
          %1505 = vmatpush1.msra.mxu0 0.0
          %1506 = vmatprep.mubr.f32.mxu0 0.0
          %1507 = vmatmul.mubr.f32.gmra.mrb[0].mxu0 %v1418
          %v1508 = vpop.f32.mrb[0].mxu0
          %v1509 = vadd.f32 %v1440, %v1508
          %v1510 = vpop.f32.mrb[0].mxu0
          %1511 = vdwg.mxu0
          %1512 = vst [vmem:[#allocation18] sm:$0xff] %v1509
        $region104: #{tpu_custom_call.1} parent=63 // pred_fallthru
          _
        // Predicated region
        $region105: #{tpu_custom_call.1} parent=63 // pred_check
          %p1513 = pneg %p292
        $region106: #{tpu_custom_call.1} parent=63 // pred_check_branch
          %1515 = sbr.rel (%p1513) target = $region108
        $region107: #{tpu_custom_call.1} parent=63 // pred_region
          %s1517 = ssub.s32 2048, 2048
          %1518 = vsyncadd [#allocation6], %s1517
          %s1519 = sshll.u32 [#allocation15], 4
          %s1520 = int_to_ptr.vmem [resolvable:$true] %s1519
          %1525 = dma.vmem_to_hbm [thread:$0]  %s1520, 2048, %s11, [#allocation6], 128, 128, 8
        $region108: #{tpu_custom_call.1} parent=63 // pred_fallthru
          _
        // Predicated region
        $region109: #{tpu_custom_call.1} parent=63 // pred_check
          %p1526 = pneg %p313
        $region110: #{tpu_custom_call.1} parent=63 // pred_check_branch
          %1528 = sbr.rel (%p1526) target = $region112
        $region111: #{tpu_custom_call.1} parent=63 // pred_region
          %s1530 = ssub.s32 128, 128
          %1531 = vsyncadd [#allocation17], %s1530
          %s1533 = sshll.u32 [#allocation16], 4
          %s1534 = int_to_ptr.vmem [resolvable:$true] %s1533
          %1536 = dma.vmem_to_hbm [thread:$0]  %s1534, 128, %s12, [#allocation17]
        $region112: #{tpu_custom_call.1} parent=63 // pred_fallthru
          _
        // Predicated region
        $region113: #{tpu_custom_call.1} parent=63 // pred_check
          %p1537 = pneg %p334
        $region114: #{tpu_custom_call.1} parent=63 // pred_check_branch
          %1539 = sbr.rel (%p1537) target = $region116
        $region115: #{tpu_custom_call.1} parent=63 // pred_region
          %s1541 = ssub.s32 128, 128
          %1542 = vsyncadd [#allocation17], %s1541
          %s1544 = sshll.u32 [#allocation18], 4
          %s1545 = int_to_ptr.vmem [resolvable:$true] %s1544
          %1547 = dma.vmem_to_hbm [thread:$0]  %s1545, 128, %s13, [#allocation17]
        $region116: #{tpu_custom_call.1} parent=63 // pred_fallthru
          _
        // Predicated region
        $region117: #{tpu_custom_call.1} parent=63 // pred_check
          %p1548 = pneg %p292
        $region118: #{tpu_custom_call.1} parent=63 // pred_check_branch
          %1550 = sbr.rel (%p1548) target = $region120
        $region119: #{tpu_custom_call.1} parent=63 // pred_region
          %1551 = dma.done [#allocation6], 2048
        $region120: #{tpu_custom_call.1} parent=63 // pred_fallthru
          _
        // Predicated region
        $region121: #{tpu_custom_call.1} parent=63 // pred_check
          %p1552 = pneg %p313
        $region122: #{tpu_custom_call.1} parent=63 // pred_check_branch
          %1554 = sbr.rel (%p1552) target = $region124
        $region123: #{tpu_custom_call.1} parent=63 // pred_region
          %1555 = dma.done [#allocation17], 128
        $region124: #{tpu_custom_call.1} parent=63 // pred_fallthru
          _
        // Predicated region
        $region125: #{tpu_custom_call.1} parent=63 // pred_check
          %p1556 = pneg %p334
        $region126: #{tpu_custom_call.1} parent=63 // pred_check_branch
          %1558 = sbr.rel (%p1556) target = $region128
        $region127: #{tpu_custom_call.1} parent=63 // pred_region
          %1559 = dma.done [#allocation17], 128
        $region128: #{tpu_custom_call.1} parent=63 // pred_fallthru
          _
      $region64: #{tpu_custom_call.1} parent=5 // pred_fallthru
        _
      %p1560 = scmp.le.s32.totalorder 2, %s26
      // Predicated region
      $region129: #{tpu_custom_call.1} parent=5 // pred_check
        %p1561 = pneg %p1560
      $region130: #{tpu_custom_call.1} parent=5 // pred_check_branch
        %1563 = sbr.rel (%p1561) target = $region132
      $region131: #{tpu_custom_call.1} parent=5 // pred_region
        %s1564 = ssub.s32 %s26, 2
      $region132: #{tpu_custom_call.1} parent=5 // pred_fallthru
        _
    $region6: #{tpu_custom_call.1} parent=1 // loop_footer
      %s30 = sadd.s32 1, %s26
    $region7: #{tpu_custom_call.1} parent=1 // loop_footer_branch
      %25 = sbr.rel target = $region3
    $region8: #{tpu_custom_call.1} parent=1 // loop_exit
      _
    %1565 = vsyncpa [#allocation5], 1
    %s1566 = scalar_lea.sflag [#allocation5], 1
    %1567 = vsyncpa %s1566, 1
    %1568 = vsyncpa [#allocation8], 1
    %1569 = vsyncpa [#allocation11], 1
    %1570 = vsyncpa [#allocation14], 1
    %1571 = vsyncpa [#allocation6], 1
    %s1572 = scalar_lea.sflag [#allocation6], 1
    %1573 = vsyncpa %s1572, 1
    %1574 = vsyncpa [#allocation17], 1

</llo_original>
